<compile_context>
chip_gen: v6e
topology: v6e:2x2x1
jax: 0.10.0
libtpu: 0.0.40
codegen_flags: <defaults>
</compile_context>

<pallas_src>
import functools

import jax
import jax.numpy as jnp
from jax import lax
from jax.experimental import pallas as pl
from jax.experimental.pallas import tpu as pltpu

LANE = 128
SUBLANE = 8
MiB = 1 << 20


def _round_up(x, m):
    return (x + m - 1) // m * m


def _pick_chunk(T, cap=32):
    """Largest chunk size <= cap that divides T."""
    for tc in range(min(T, cap), 0, -1):
        if T % tc == 0:
            return tc
    return 1


# ---------------------------------------------------------------------------
# LSTM recurrence: one T-chunk per grid step, h/c resident across the grid.
# ---------------------------------------------------------------------------
def lstm_kernel(emb_ref, wih_ref, whh_ref, b_ref, hn_ref, cn_ref, gx_sc, *,
                unroll):
    """emb_ref : (TC, Bp, E)   time-major embedded tokens for this chunk
    wih_ref : (E, 4Hp)       W_ih^T, gate blocks [i|f|g|o] zero-padded to Hp
    whh_ref : (Hp, 4Hp)      W_hh^T, rows and gate blocks zero-padded to Hp
    b_ref   : (1, 4Hp)       b_ih + b_hh, gate blocks zero-padded to Hp
    hn_ref  : (Bp, Hp)       hidden state, resident across the whole grid
    cn_ref  : (Bp, Hp)       cell state, resident across the whole grid
    gx_sc   : (TC, Bp, 4Hp)  scratch for this chunk's input projection
    """
    TC, Bp, E = emb_ref.shape
    Hp = whh_ref.shape[0]

    @pl.when(pl.program_id(0) == 0)
    def _():
        hn_ref[...] = jnp.zeros_like(hn_ref)
        cn_ref[...] = jnp.zeros_like(cn_ref)

    # One batched MXU matmul for the whole chunk's input projection; the bias
    # is folded in here so nothing is re-broadcast inside the serial loop.
    # (TC, Bp, E) -> (TC*Bp, E) is layout-free because Bp is a sublane multiple.
    gx = (jnp.dot(emb_ref[...].reshape(TC * Bp, E), wih_ref[...],
                  preferred_element_type=jnp.float32) + b_ref[...])
    gx_sc[...] = gx.reshape(TC, Bp, 4 * Hp)

    whh = whh_ref[...]  # hoisted: constant RHS for every step of the chunk

    def step(t, carry):
        h, c = carry
        # gx_sc[t] is an (8,128)-aligned (Bp, 4Hp) view -> clean vreg loads.
        gates = gx_sc[t] + jnp.dot(h, whh, preferred_element_type=jnp.float32)
        i_g = jax.nn.sigmoid(gates[:, 0:Hp])
        f_g = jax.nn.sigmoid(gates[:, Hp:2 * Hp])
        g_g = jnp.tanh(gates[:, 2 * Hp:3 * Hp])
        o_g = jax.nn.sigmoid(gates[:, 3 * Hp:4 * Hp])
        c = f_g * c + i_g * g_g
        h = o_g * jnp.tanh(c)
        return h, c

    # fori_loop keeps LLO visibility while bounding vreg live ranges; the carry
    # starts from the state left by the previous chunk (resident output block).
    h, c = lax.fori_loop(0, TC, step, (hn_ref[...], cn_ref[...]),
                         unroll=unroll)
    hn_ref[...] = h
    cn_ref[...] = c


# ---------------------------------------------------------------------------
# Final Linear: one lane-dense vocab tile per ("parallel") grid step.
# ---------------------------------------------------------------------------
def fc_kernel(h_ref, w_ref, b_ref, out_ref):
    out_ref[...] = (
        jnp.dot(h_ref[...], w_ref[...], preferred_element_type=jnp.float32)
        + b_ref[...])


def simple_chat_forward(x_ids, params):
    """Embedding gather (JAX glue) + Pallas chunked-LSTM + Pallas tiled FC."""
    emb_table, w_ih, w_hh, b_ih, b_hh, fc_w, fc_b = params
    B, T = x_ids.shape
    H = w_hh.shape[1]            # torch weight_hh_l0 shape is (4H, H)
    V = fc_w.shape[0]
    E = emb_table.shape[1]
    Hp = _round_up(H, LANE)
    Vp = _round_up(V, LANE)
    Bp = _round_up(B, SUBLANE)
    TC = _pick_chunk(T)
    n_chunks = T // TC

    # TODO(synk): the embedding lookup (data-dependent gather) stays in JAX glue;
    # folding it in via PrefetchScalarGridSpec + pl.Element rows only pays at
    # real E/T/B sizes.
    emb_tm = jnp.take(emb_table, jnp.transpose(x_ids), axis=0)       # (T, B, E)
    emb_tm = jnp.pad(emb_tm, ((0, 0), (0, Bp - B), (0, 0)))          # (T, Bp, E)

    # Pad each gate block from H to Hp lanes (exact for zero initial state).
    def pad_gate_cols(w):                                            # (r,4H)->(r,4Hp)
        r = w.shape[0]
        w4 = w.reshape(r, 4, H)
        return jnp.pad(w4, ((0, 0), (0, 0), (0, Hp - H))).reshape(r, 4 * Hp)

    wih_t = pad_gate_cols(jnp.transpose(w_ih))                       # (E, 4Hp)
    whh_t = jnp.pad(pad_gate_cols(jnp.transpose(w_hh)),
                    ((0, Hp - H), (0, 0)))                           # (Hp, 4Hp)
    bias = pad_gate_cols((b_ih + b_hh)[None, :])                     # (1, 4Hp)

    f32, bf16 = 4, 2
    lstm_bytes = (2 * TC * Bp * E * f32          # emb chunk, double-buffered
                  + E * 4 * Hp * f32             # W_ih^T (resident)
                  + Hp * 4 * Hp * f32            # W_hh^T (resident)
                  + 4 * Hp * f32                 # bias
                  + TC * Bp * 4 * Hp * f32       # gx scratch
                  + 2 * Bp * Hp * f32)           # h, c
    lstm_vmem_limit = min(max(int(lstm_bytes * 1.5) + 4 * MiB, 16 * MiB),
                          64 * MiB)
    unroll = TC if TC <= 8 else 2                # full unroll only for tiny chunks

    h_n, c_n = pl.pallas_call(
        functools.partial(lstm_kernel, unroll=unroll),
        out_shape=(jax.ShapeDtypeStruct((Bp, Hp), jnp.float32),
                   jax.ShapeDtypeStruct((Bp, Hp), jnp.float32)),
        grid=(n_chunks,),
        in_specs=[pl.BlockSpec((TC, Bp, E), lambda i: (i, 0, 0)),
                  pl.BlockSpec((E, 4 * Hp), lambda i: (0, 0)),
                  pl.BlockSpec((Hp, 4 * Hp), lambda i: (0, 0)),
                  pl.BlockSpec((1, 4 * Hp), lambda i: (0, 0))],
        out_specs=(pl.BlockSpec((Bp, Hp), lambda i: (0, 0)),
                   pl.BlockSpec((Bp, Hp), lambda i: (0, 0))),
        scratch_shapes=[pltpu.VMEM((TC, Bp, 4 * Hp), jnp.float32)],
        compiler_params=pltpu.CompilerParams(
            dimension_semantics=("arbitrary",),   # serial recurrence
            vmem_limit_bytes=lstm_vmem_limit),
    )(emb_tm, wih_t, whh_t, bias)

    # ----- final projection: bf16 weights, f32 accumulate, vocab-tiled -------
    fcw_bf = jnp.pad(jnp.transpose(fc_w),
                     ((0, Hp - H), (0, Vp - V))).astype(jnp.bfloat16)  # (Hp, Vp)
    fcb = jnp.pad(fc_b, (0, Vp - V))[None, :]                          # (1, Vp) f32
    h_bf = h_n.astype(jnp.bfloat16)

    # Biggest vocab tile whose double-buffered bf16 weight slab stays well
    # inside every chip's VMEM (v7x has only 64 MiB total per TC).
    TV = 128
    for tv in (2048, 1024, 512, 256, 128):
        if Vp % tv == 0 and 2 * Hp * tv * bf16 <= 16 * MiB:
            TV = tv
            break

    fc_bytes = (2 * Hp * TV * bf16               # weight tile, double-buffered
                + Bp * Hp * bf16                 # h (resident)
                + 2 * Bp * TV * f32              # logits tile, double-buffered
                + 2 * TV * f32)                  # bias tile
    fc_vmem_limit = min(max(int(fc_bytes * 1.5) + 4 * MiB, 16 * MiB), 64 * MiB)

    logits_p = pl.pallas_call(
        fc_kernel,
        out_shape=jax.ShapeDtypeStruct((Bp, Vp), jnp.float32),
        grid=(Vp // TV,),
        in_specs=[pl.BlockSpec((Bp, Hp), lambda j: (0, 0)),
                  pl.BlockSpec((Hp, TV), lambda j: (0, j)),
                  pl.BlockSpec((1, TV), lambda j: (0, j))],
        out_specs=pl.BlockSpec((Bp, TV), lambda j: (0, j)),
        compiler_params=pltpu.CompilerParams(
            dimension_semantics=("parallel",),    # shards vocab across TCs (v7x)
            vmem_limit_bytes=fc_vmem_limit),
        cost_estimate=pl.CostEstimate(
            flops=2 * Bp * Hp * Vp,
            transcendentals=0,
            bytes_accessed=(Hp * Vp * bf16 + Bp * Hp * bf16
                            + Bp * Vp * f32 + Vp * f32)),
    )(h_bf, fcw_bf, fcb)

    logits = logits_p[:B, :V]
    # PyTorch LSTM returns (num_layers=1, B, H) hidden/cell tensors.
    h_out = h_n[:B, :H][None, :, :]
    c_out = c_n[:B, :H][None, :, :]
    return logits, (h_out, c_out)


# ---------------------------------------------------------------------------
# Pure-JAX reference (PyTorch semantics) for a sanity check at toy sizes.
# ---------------------------------------------------------------------------
def reference_forward(x_ids, params):
    emb_table, w_ih, w_hh, b_ih, b_hh, fc_w, fc_b = params
    B, T = x_ids.shape
    H = w_hh.shape[1]
    emb = jnp.take(emb_table, x_ids, axis=0)                 # (B, T, E)
    h = jnp.zeros((B, H), jnp.float32)
    c = jnp.zeros((B, H), jnp.float32)
    for t in range(T):
        gates = emb[:, t, :] @ w_ih.T + b_ih + h @ w_hh.T + b_hh
        i_g = jax.nn.sigmoid(gates[:, 0:H])
        f_g = jax.nn.sigmoid(gates[:, H:2 * H])
        g_g = jnp.tanh(gates[:, 2 * H:3 * H])
        o_g = jax.nn.sigmoid(gates[:, 3 * H:4 * H])
        c = f_g * c + i_g * g_g
        h = o_g * jnp.tanh(c)
    logits = h @ fc_w.T + fc_b
    return logits, (h[None], c[None])


def init_params(key, vocab_size, embed_dim, hidden_dim):
    ks = jax.random.split(key, 7)
    scale = 1.0 / jnp.sqrt(hidden_dim)
    emb_table = jax.random.normal(ks[0], (vocab_size, embed_dim), jnp.float32)
    w_ih = jax.random.uniform(ks[1], (4 * hidden_dim, embed_dim), jnp.float32,
                              -scale, scale)
    w_hh = jax.random.uniform(ks[2], (4 * hidden_dim, hidden_dim), jnp.float32,
                              -scale, scale)
    b_ih = jax.random.uniform(ks[3], (4 * hidden_dim,), jnp.float32, -scale, scale)
    b_hh = jax.random.uniform(ks[4], (4 * hidden_dim,), jnp.float32, -scale, scale)
    fc_w = jax.random.uniform(ks[5], (vocab_size, hidden_dim), jnp.float32,
                              -scale, scale)
    fc_b = jax.random.uniform(ks[6], (vocab_size,), jnp.float32, -scale, scale)
    return (emb_table, w_ih, w_hh, b_ih, b_hh, fc_w, fc_b)


if __name__ == "__main__":
    VOCAB, EMBED, HIDDEN = 32, 16, 32
    BATCH, SEQ = 2, 8

    key = jax.random.PRNGKey(0)
    k_param, k_tok = jax.random.split(key)
    params = init_params(k_param, VOCAB, EMBED, HIDDEN)
    x = jax.random.randint(k_tok, (BATCH, SEQ), 0, VOCAB, dtype=jnp.int32)

    logits, (h_n, c_n) = simple_chat_forward(x, params)
    jax.block_until_ready((logits, h_n, c_n))

    assert logits.shape == (BATCH, VOCAB)
    assert h_n.shape == (1, BATCH, HIDDEN)
    assert c_n.shape == (1, BATCH, HIDDEN)

    # Loose-tolerance check vs. a pure-JAX reference (bf16 FC weights + MXU
    # bf16 passes => not bit-exact with f32).
    ref_logits, (ref_h, ref_c) = reference_forward(x, params)
    assert jnp.allclose(h_n, ref_h, atol=2e-2, rtol=2e-2)
    assert jnp.allclose(c_n, ref_c, atol=2e-2, rtol=2e-2)
    assert jnp.allclose(logits, ref_logits, atol=2e-2, rtol=2e-2)

    print("KERNEL_OK")
</pallas_src>

<mosaic_0001>
module attributes {stable_mosaic.version = 11 : i64} {
  func.func @lstm_kernel(%arg0: i32, %arg1: memref<8x8x16xf32, #tpu.memory_space<vmem>>, %arg2: memref<16x512xf32, #tpu.memory_space<vmem>>, %arg3: memref<128x512xf32, #tpu.memory_space<vmem>>, %arg4: memref<1x512xf32, #tpu.memory_space<vmem>>, %arg5: memref<8x128xf32, #tpu.memory_space<vmem>>, %arg6: memref<8x128xf32, #tpu.memory_space<vmem>>, %arg7: memref<8x8x512xf32, #tpu.memory_space<vmem>>) attributes {dimension_semantics = [#tpu.dimension_semantics<arbitrary>], iteration_bounds = array<i64: 1>, scalar_prefetch = 0 : i64, scratch_operands = 1 : i64, tpu.core_type = #tpu.core_type<tc>, window_params = [{transform_indices = @transform_0, window_bounds = array<i64: 8, 8, 16>}, {pipeline_mode = #tpu.pipeline_mode<synchronous>, transform_indices = @transform_1, window_bounds = array<i64: 16, 512>}, {pipeline_mode = #tpu.pipeline_mode<synchronous>, transform_indices = @transform_2, window_bounds = array<i64: 128, 512>}, {pipeline_mode = #tpu.pipeline_mode<synchronous>, transform_indices = @transform_3, window_bounds = array<i64: 1, 512>}, {pipeline_mode = #tpu.pipeline_mode<synchronous>, transform_indices = @transform_4, window_bounds = array<i64: 8, 128>}, {pipeline_mode = #tpu.pipeline_mode<synchronous>, transform_indices = @transform_5, window_bounds = array<i64: 8, 128>}]} {
    %c0_i32 = arith.constant 0 : i32
    %0 = arith.cmpi eq, %arg0, %c0_i32 : i32
    %1 = arith.extui %0 : i1 to i32
    %c0_i32_0 = arith.constant 0 : i32
    %2 = arith.cmpi ne, %1, %c0_i32_0 : i32
    scf.if %2 {
      %cst_69 = arith.constant 0.000000e+00 : f32
      %257 = vector.broadcast %cst_69 : f32 to vector<8x128xf32>
      %c0_70 = arith.constant 0 : index
      %c0_71 = arith.constant 0 : index
      %258 = vector.load %arg5[%c0_70, %c0_71] : memref<8x128xf32, #tpu.memory_space<vmem>>, vector<8x128xf32>
      tpu.vector_store %arg5[%c0_70, %c0_71], %257 {strides = array<i32>} : memref<8x128xf32, #tpu.memory_space<vmem>>, vector<8x128xf32>,
      %cst_72 = arith.constant 0.000000e+00 : f32
      %259 = vector.broadcast %cst_72 : f32 to vector<8x128xf32>
      %c0_73 = arith.constant 0 : index
      %c0_74 = arith.constant 0 : index
      %260 = vector.load %arg6[%c0_73, %c0_74] : memref<8x128xf32, #tpu.memory_space<vmem>>, vector<8x128xf32>
      tpu.vector_store %arg6[%c0_73, %c0_74], %259 {strides = array<i32>} : memref<8x128xf32, #tpu.memory_space<vmem>>, vector<8x128xf32>,
    } else {
    }
    %c0 = arith.constant 0 : index
    %c0_1 = arith.constant 0 : index
    %c0_2 = arith.constant 0 : index
    %3 = vector.load %arg1[%c0, %c0_1, %c0_2] : memref<8x8x16xf32, #tpu.memory_space<vmem>>, vector<8x8x16xf32>
    %4 = vector.shape_cast %3 : vector<8x8x16xf32> to vector<64x16xf32>
    %c0_3 = arith.constant 0 : index
    %c0_4 = arith.constant 0 : index
    %5 = vector.load %arg2[%c0_3, %c0_4] : memref<16x512xf32, #tpu.memory_space<vmem>>, vector<16x512xf32>
    %cst = arith.constant dense<0.000000e+00> : vector<64x512xf32>
    %6 = tpu.matmul %4, %5, %cst {dimension_numbers = #tpu.dot_dimension_numbers<[1], [0], [0], [1], [0, 0, 1, 1], [], []>} : vector<64x16xf32>, vector<16x512xf32>, vector<64x512xf32> -> vector<64x512xf32>
    %c0_5 = arith.constant 0 : index
    %c0_6 = arith.constant 0 : index
    %7 = vector.load %arg4[%c0_5, %c0_6] : memref<1x512xf32, #tpu.memory_space<vmem>>, vector<1x512xf32>
    %8 = vector.broadcast %7 : vector<1x512xf32> to vector<64x512xf32>
    %9 = arith.addf %6, %8 : vector<64x512xf32>
    %10 = vector.shape_cast %9 : vector<64x512xf32> to vector<8x8x512xf32>
    %c0_7 = arith.constant 0 : index
    %c0_8 = arith.constant 0 : index
    %c0_9 = arith.constant 0 : index
    %11 = vector.load %arg7[%c0_7, %c0_8, %c0_9] : memref<8x8x512xf32, #tpu.memory_space<vmem>>, vector<8x8x512xf32>
    tpu.vector_store %arg7[%c0_7, %c0_8, %c0_9], %10 {strides = array<i32>} : memref<8x8x512xf32, #tpu.memory_space<vmem>>, vector<8x8x512xf32>,
    %c0_10 = arith.constant 0 : index
    %c0_11 = arith.constant 0 : index
    %12 = vector.load %arg3[%c0_10, %c0_11] : memref<128x512xf32, #tpu.memory_space<vmem>>, vector<128x512xf32>
    %c0_12 = arith.constant 0 : index
    %c0_13 = arith.constant 0 : index
    %13 = vector.load %arg5[%c0_12, %c0_13] : memref<8x128xf32, #tpu.memory_space<vmem>>, vector<8x128xf32>
    %c0_14 = arith.constant 0 : index
    %c0_15 = arith.constant 0 : index
    %14 = vector.load %arg6[%c0_14, %c0_15] : memref<8x128xf32, #tpu.memory_space<vmem>>, vector<8x128xf32>
    %c0_i32_16 = arith.constant 0 : i32
    %15 = arith.index_cast %c0_i32_16 : i32 to index
    %c0_17 = arith.constant 0 : index
    %c0_18 = arith.constant 0 : index
    %16 = vector.load %arg7[%15, %c0_17, %c0_18] : memref<8x8x512xf32, #tpu.memory_space<vmem>>, vector<1x8x512xf32>
    %17 = vector.shape_cast %16 : vector<1x8x512xf32> to vector<8x512xf32>
    %cst_19 = arith.constant dense<0.000000e+00> : vector<8x512xf32>
    %18 = tpu.matmul %13, %12, %cst_19 {dimension_numbers = #tpu.dot_dimension_numbers<[1], [0], [0], [1], [0, 0, 1, 1], [], []>} : vector<8x128xf32>, vector<128x512xf32>, vector<8x512xf32> -> vector<8x512xf32>
    %19 = arith.addf %17, %18 : vector<8x512xf32>
    %20 = vector.extract_strided_slice %19 {offsets = [0, 0], sizes = [8, 128], strides = [1, 1]} : vector<8x512xf32> to vector<8x128xf32>
    %21 = arith.negf %20 : vector<8x128xf32>
    %22 = math.exp %21 : vector<8x128xf32>
    %cst_20 = arith.constant 1.000000e+00 : f32
    %23 = vector.broadcast %cst_20 : f32 to vector<8x128xf32>
    %24 = arith.addf %23, %22 : vector<8x128xf32>
    %25 = arith.divf %23, %24 : vector<8x128xf32>
    %26 = vector.extract_strided_slice %19 {offsets = [0, 128], sizes = [8, 128], strides = [1, 1]} : vector<8x512xf32> to vector<8x128xf32>
    %27 = arith.negf %26 : vector<8x128xf32>
    %28 = math.exp %27 : vector<8x128xf32>
    %cst_21 = arith.constant 1.000000e+00 : f32
    %29 = vector.broadcast %cst_21 : f32 to vector<8x128xf32>
    %30 = arith.addf %29, %28 : vector<8x128xf32>
    %31 = arith.divf %29, %30 : vector<8x128xf32>
    %32 = vector.extract_strided_slice %19 {offsets = [0, 256], sizes = [8, 128], strides = [1, 1]} : vector<8x512xf32> to vector<8x128xf32>
    %33 = math.tanh %32 : vector<8x128xf32>
    %34 = vector.extract_strided_slice %19 {offsets = [0, 384], sizes = [8, 128], strides = [1, 1]} : vector<8x512xf32> to vector<8x128xf32>
    %35 = arith.negf %34 : vector<8x128xf32>
    %36 = math.exp %35 : vector<8x128xf32>
    %cst_22 = arith.constant 1.000000e+00 : f32
    %37 = vector.broadcast %cst_22 : f32 to vector<8x128xf32>
    %38 = arith.addf %37, %36 : vector<8x128xf32>
    %39 = arith.divf %37, %38 : vector<8x128xf32>
    %40 = arith.mulf %31, %14 : vector<8x128xf32>
    %41 = arith.mulf %25, %33 : vector<8x128xf32>
    %42 = arith.addf %40, %41 : vector<8x128xf32>
    %43 = math.tanh %42 : vector<8x128xf32>
    %44 = arith.mulf %39, %43 : vector<8x128xf32>
    %c1_i32 = arith.constant 1 : i32
    %45 = arith.index_cast %c1_i32 : i32 to index
    %c0_23 = arith.constant 0 : index
    %c0_24 = arith.constant 0 : index
    %46 = vector.load %arg7[%45, %c0_23, %c0_24] : memref<8x8x512xf32, #tpu.memory_space<vmem>>, vector<1x8x512xf32>
    %47 = vector.shape_cast %46 : vector<1x8x512xf32> to vector<8x512xf32>
    %cst_25 = arith.constant dense<0.000000e+00> : vector<8x512xf32>
    %48 = tpu.matmul %44, %12, %cst_25 {dimension_numbers = #tpu.dot_dimension_numbers<[1], [0], [0], [1], [0, 0, 1, 1], [], []>} : vector<8x128xf32>, vector<128x512xf32>, vector<8x512xf32> -> vector<8x512xf32>
    %49 = arith.addf %47, %48 : vector<8x512xf32>
    %50 = vector.extract_strided_slice %49 {offsets = [0, 0], sizes = [8, 128], strides = [1, 1]} : vector<8x512xf32> to vector<8x128xf32>
    %51 = arith.negf %50 : vector<8x128xf32>
    %52 = math.exp %51 : vector<8x128xf32>
    %cst_26 = arith.constant 1.000000e+00 : f32
    %53 = vector.broadcast %cst_26 : f32 to vector<8x128xf32>
    %54 = arith.addf %53, %52 : vector<8x128xf32>
    %55 = arith.divf %53, %54 : vector<8x128xf32>
    %56 = vector.extract_strided_slice %49 {offsets = [0, 128], sizes = [8, 128], strides = [1, 1]} : vector<8x512xf32> to vector<8x128xf32>
    %57 = arith.negf %56 : vector<8x128xf32>
    %58 = math.exp %57 : vector<8x128xf32>
    %cst_27 = arith.constant 1.000000e+00 : f32
    %59 = vector.broadcast %cst_27 : f32 to vector<8x128xf32>
    %60 = arith.addf %59, %58 : vector<8x128xf32>
    %61 = arith.divf %59, %60 : vector<8x128xf32>
    %62 = vector.extract_strided_slice %49 {offsets = [0, 256], sizes = [8, 128], strides = [1, 1]} : vector<8x512xf32> to vector<8x128xf32>
    %63 = math.tanh %62 : vector<8x128xf32>
    %64 = vector.extract_strided_slice %49 {offsets = [0, 384], sizes = [8, 128], strides = [1, 1]} : vector<8x512xf32> to vector<8x128xf32>
    %65 = arith.negf %64 : vector<8x128xf32>
    %66 = math.exp %65 : vector<8x128xf32>
    %cst_28 = arith.constant 1.000000e+00 : f32
    %67 = vector.broadcast %cst_28 : f32 to vector<8x128xf32>
    %68 = arith.addf %67, %66 : vector<8x128xf32>
    %69 = arith.divf %67, %68 : vector<8x128xf32>
    %70 = arith.mulf %61, %42 : vector<8x128xf32>
    %71 = arith.mulf %55, %63 : vector<8x128xf32>
    %72 = arith.addf %70, %71 : vector<8x128xf32>
    %73 = math.tanh %72 : vector<8x128xf32>
    %74 = arith.mulf %69, %73 : vector<8x128xf32>
    %c2_i32 = arith.constant 2 : i32
    %75 = arith.index_cast %c2_i32 : i32 to index
    %c0_29 = arith.constant 0 : index
    %c0_30 = arith.constant 0 : index
    %76 = vector.load %arg7[%75, %c0_29, %c0_30] : memref<8x8x512xf32, #tpu.memory_space<vmem>>, vector<1x8x512xf32>
    %77 = vector.shape_cast %76 : vector<1x8x512xf32> to vector<8x512xf32>
    %cst_31 = arith.constant dense<0.000000e+00> : vector<8x512xf32>
    %78 = tpu.matmul %74, %12, %cst_31 {dimension_numbers = #tpu.dot_dimension_numbers<[1], [0], [0], [1], [0, 0, 1, 1], [], []>} : vector<8x128xf32>, vector<128x512xf32>, vector<8x512xf32> -> vector<8x512xf32>
    %79 = arith.addf %77, %78 : vector<8x512xf32>
    %80 = vector.extract_strided_slice %79 {offsets = [0, 0], sizes = [8, 128], strides = [1, 1]} : vector<8x512xf32> to vector<8x128xf32>
    %81 = arith.negf %80 : vector<8x128xf32>
    %82 = math.exp %81 : vector<8x128xf32>
    %cst_32 = arith.constant 1.000000e+00 : f32
    %83 = vector.broadcast %cst_32 : f32 to vector<8x128xf32>
    %84 = arith.addf %83, %82 : vector<8x128xf32>
    %85 = arith.divf %83, %84 : vector<8x128xf32>
    %86 = vector.extract_strided_slice %79 {offsets = [0, 128], sizes = [8, 128], strides = [1, 1]} : vector<8x512xf32> to vector<8x128xf32>
    %87 = arith.negf %86 : vector<8x128xf32>
    %88 = math.exp %87 : vector<8x128xf32>
    %cst_33 = arith.constant 1.000000e+00 : f32
    %89 = vector.broadcast %cst_33 : f32 to vector<8x128xf32>
    %90 = arith.addf %89, %88 : vector<8x128xf32>
    %91 = arith.divf %89, %90 : vector<8x128xf32>
    %92 = vector.extract_strided_slice %79 {offsets = [0, 256], sizes = [8, 128], strides = [1, 1]} : vector<8x512xf32> to vector<8x128xf32>
    %93 = math.tanh %92 : vector<8x128xf32>
    %94 = vector.extract_strided_slice %79 {offsets = [0, 384], sizes = [8, 128], strides = [1, 1]} : vector<8x512xf32> to vector<8x128xf32>
    %95 = arith.negf %94 : vector<8x128xf32>
    %96 = math.exp %95 : vector<8x128xf32>
    %cst_34 = arith.constant 1.000000e+00 : f32
    %97 = vector.broadcast %cst_34 : f32 to vector<8x128xf32>
    %98 = arith.addf %97, %96 : vector<8x128xf32>
    %99 = arith.divf %97, %98 : vector<8x128xf32>
    %100 = arith.mulf %91, %72 : vector<8x128xf32>
    %101 = arith.mulf %85, %93 : vector<8x128xf32>
    %102 = arith.addf %100, %101 : vector<8x128xf32>
    %103 = math.tanh %102 : vector<8x128xf32>
    %104 = arith.mulf %99, %103 : vector<8x128xf32>
    %c3_i32 = arith.constant 3 : i32
    %105 = arith.index_cast %c3_i32 : i32 to index
    %c0_35 = arith.constant 0 : index
    %c0_36 = arith.constant 0 : index
    %106 = vector.load %arg7[%105, %c0_35, %c0_36] : memref<8x8x512xf32, #tpu.memory_space<vmem>>, vector<1x8x512xf32>
    %107 = vector.shape_cast %106 : vector<1x8x512xf32> to vector<8x512xf32>
    %cst_37 = arith.constant dense<0.000000e+00> : vector<8x512xf32>
    %108 = tpu.matmul %104, %12, %cst_37 {dimension_numbers = #tpu.dot_dimension_numbers<[1], [0], [0], [1], [0, 0, 1, 1], [], []>} : vector<8x128xf32>, vector<128x512xf32>, vector<8x512xf32> -> vector<8x512xf32>
    %109 = arith.addf %107, %108 : vector<8x512xf32>
    %110 = vector.extract_strided_slice %109 {offsets = [0, 0], sizes = [8, 128], strides = [1, 1]} : vector<8x512xf32> to vector<8x128xf32>
    %111 = arith.negf %110 : vector<8x128xf32>
    %112 = math.exp %111 : vector<8x128xf32>
    %cst_38 = arith.constant 1.000000e+00 : f32
    %113 = vector.broadcast %cst_38 : f32 to vector<8x128xf32>
    %114 = arith.addf %113, %112 : vector<8x128xf32>
    %115 = arith.divf %113, %114 : vector<8x128xf32>
    %116 = vector.extract_strided_slice %109 {offsets = [0, 128], sizes = [8, 128], strides = [1, 1]} : vector<8x512xf32> to vector<8x128xf32>
    %117 = arith.negf %116 : vector<8x128xf32>
    %118 = math.exp %117 : vector<8x128xf32>
    %cst_39 = arith.constant 1.000000e+00 : f32
    %119 = vector.broadcast %cst_39 : f32 to vector<8x128xf32>
    %120 = arith.addf %119, %118 : vector<8x128xf32>
    %121 = arith.divf %119, %120 : vector<8x128xf32>
    %122 = vector.extract_strided_slice %109 {offsets = [0, 256], sizes = [8, 128], strides = [1, 1]} : vector<8x512xf32> to vector<8x128xf32>
    %123 = math.tanh %122 : vector<8x128xf32>
    %124 = vector.extract_strided_slice %109 {offsets = [0, 384], sizes = [8, 128], strides = [1, 1]} : vector<8x512xf32> to vector<8x128xf32>
    %125 = arith.negf %124 : vector<8x128xf32>
    %126 = math.exp %125 : vector<8x128xf32>
    %cst_40 = arith.constant 1.000000e+00 : f32
    %127 = vector.broadcast %cst_40 : f32 to vector<8x128xf32>
    %128 = arith.addf %127, %126 : vector<8x128xf32>
    %129 = arith.divf %127, %128 : vector<8x128xf32>
    %130 = arith.mulf %121, %102 : vector<8x128xf32>
    %131 = arith.mulf %115, %123 : vector<8x128xf32>
    %132 = arith.addf %130, %131 : vector<8x128xf32>
    %133 = math.tanh %132 : vector<8x128xf32>
    %134 = arith.mulf %129, %133 : vector<8x128xf32>
    %c4_i32 = arith.constant 4 : i32
    %135 = arith.index_cast %c4_i32 : i32 to index
    %c0_41 = arith.constant 0 : index
    %c0_42 = arith.constant 0 : index
    %136 = vector.load %arg7[%135, %c0_41, %c0_42] : memref<8x8x512xf32, #tpu.memory_space<vmem>>, vector<1x8x512xf32>
    %137 = vector.shape_cast %136 : vector<1x8x512xf32> to vector<8x512xf32>
    %cst_43 = arith.constant dense<0.000000e+00> : vector<8x512xf32>
    %138 = tpu.matmul %134, %12, %cst_43 {dimension_numbers = #tpu.dot_dimension_numbers<[1], [0], [0], [1], [0, 0, 1, 1], [], []>} : vector<8x128xf32>, vector<128x512xf32>, vector<8x512xf32> -> vector<8x512xf32>
    %139 = arith.addf %137, %138 : vector<8x512xf32>
    %140 = vector.extract_strided_slice %139 {offsets = [0, 0], sizes = [8, 128], strides = [1, 1]} : vector<8x512xf32> to vector<8x128xf32>
    %141 = arith.negf %140 : vector<8x128xf32>
    %142 = math.exp %141 : vector<8x128xf32>
    %cst_44 = arith.constant 1.000000e+00 : f32
    %143 = vector.broadcast %cst_44 : f32 to vector<8x128xf32>
    %144 = arith.addf %143, %142 : vector<8x128xf32>
    %145 = arith.divf %143, %144 : vector<8x128xf32>
    %146 = vector.extract_strided_slice %139 {offsets = [0, 128], sizes = [8, 128], strides = [1, 1]} : vector<8x512xf32> to vector<8x128xf32>
    %147 = arith.negf %146 : vector<8x128xf32>
    %148 = math.exp %147 : vector<8x128xf32>
    %cst_45 = arith.constant 1.000000e+00 : f32
    %149 = vector.broadcast %cst_45 : f32 to vector<8x128xf32>
    %150 = arith.addf %149, %148 : vector<8x128xf32>
    %151 = arith.divf %149, %150 : vector<8x128xf32>
    %152 = vector.extract_strided_slice %139 {offsets = [0, 256], sizes = [8, 128], strides = [1, 1]} : vector<8x512xf32> to vector<8x128xf32>
    %153 = math.tanh %152 : vector<8x128xf32>
    %154 = vector.extract_strided_slice %139 {offsets = [0, 384], sizes = [8, 128], strides = [1, 1]} : vector<8x512xf32> to vector<8x128xf32>
    %155 = arith.negf %154 : vector<8x128xf32>
    %156 = math.exp %155 : vector<8x128xf32>
    %cst_46 = arith.constant 1.000000e+00 : f32
    %157 = vector.broadcast %cst_46 : f32 to vector<8x128xf32>
    %158 = arith.addf %157, %156 : vector<8x128xf32>
    %159 = arith.divf %157, %158 : vector<8x128xf32>
    %160 = arith.mulf %151, %132 : vector<8x128xf32>
    %161 = arith.mulf %145, %153 : vector<8x128xf32>
    %162 = arith.addf %160, %161 : vector<8x128xf32>
    %163 = math.tanh %162 : vector<8x128xf32>
    %164 = arith.mulf %159, %163 : vector<8x128xf32>
    %c5_i32 = arith.constant 5 : i32
    %165 = arith.index_cast %c5_i32 : i32 to index
    %c0_47 = arith.constant 0 : index
    %c0_48 = arith.constant 0 : index
    %166 = vector.load %arg7[%165, %c0_47, %c0_48] : memref<8x8x512xf32, #tpu.memory_space<vmem>>, vector<1x8x512xf32>
    %167 = vector.shape_cast %166 : vector<1x8x512xf32> to vector<8x512xf32>
    %cst_49 = arith.constant dense<0.000000e+00> : vector<8x512xf32>
    %168 = tpu.matmul %164, %12, %cst_49 {dimension_numbers = #tpu.dot_dimension_numbers<[1], [0], [0], [1], [0, 0, 1, 1], [], []>} : vector<8x128xf32>, vector<128x512xf32>, vector<8x512xf32> -> vector<8x512xf32>
    %169 = arith.addf %167, %168 : vector<8x512xf32>
    %170 = vector.extract_strided_slice %169 {offsets = [0, 0], sizes = [8, 128], strides = [1, 1]} : vector<8x512xf32> to vector<8x128xf32>
    %171 = arith.negf %170 : vector<8x128xf32>
    %172 = math.exp %171 : vector<8x128xf32>
    %cst_50 = arith.constant 1.000000e+00 : f32
    %173 = vector.broadcast %cst_50 : f32 to vector<8x128xf32>
    %174 = arith.addf %173, %172 : vector<8x128xf32>
    %175 = arith.divf %173, %174 : vector<8x128xf32>
    %176 = vector.extract_strided_slice %169 {offsets = [0, 128], sizes = [8, 128], strides = [1, 1]} : vector<8x512xf32> to vector<8x128xf32>
    %177 = arith.negf %176 : vector<8x128xf32>
    %178 = math.exp %177 : vector<8x128xf32>
    %cst_51 = arith.constant 1.000000e+00 : f32
    %179 = vector.broadcast %cst_51 : f32 to vector<8x128xf32>
    %180 = arith.addf %179, %178 : vector<8x128xf32>
    %181 = arith.divf %179, %180 : vector<8x128xf32>
    %182 = vector.extract_strided_slice %169 {offsets = [0, 256], sizes = [8, 128], strides = [1, 1]} : vector<8x512xf32> to vector<8x128xf32>
    %183 = math.tanh %182 : vector<8x128xf32>
    %184 = vector.extract_strided_slice %169 {offsets = [0, 384], sizes = [8, 128], strides = [1, 1]} : vector<8x512xf32> to vector<8x128xf32>
    %185 = arith.negf %184 : vector<8x128xf32>
    %186 = math.exp %185 : vector<8x128xf32>
    %cst_52 = arith.constant 1.000000e+00 : f32
    %187 = vector.broadcast %cst_52 : f32 to vector<8x128xf32>
    %188 = arith.addf %187, %186 : vector<8x128xf32>
    %189 = arith.divf %187, %188 : vector<8x128xf32>
    %190 = arith.mulf %181, %162 : vector<8x128xf32>
    %191 = arith.mulf %175, %183 : vector<8x128xf32>
    %192 = arith.addf %190, %191 : vector<8x128xf32>
    %193 = math.tanh %192 : vector<8x128xf32>
    %194 = arith.mulf %189, %193 : vector<8x128xf32>
    %c6_i32 = arith.constant 6 : i32
    %195 = arith.index_cast %c6_i32 : i32 to index
    %c0_53 = arith.constant 0 : index
    %c0_54 = arith.constant 0 : index
    %196 = vector.load %arg7[%195, %c0_53, %c0_54] : memref<8x8x512xf32, #tpu.memory_space<vmem>>, vector<1x8x512xf32>
    %197 = vector.shape_cast %196 : vector<1x8x512xf32> to vector<8x512xf32>
    %cst_55 = arith.constant dense<0.000000e+00> : vector<8x512xf32>
    %198 = tpu.matmul %194, %12, %cst_55 {dimension_numbers = #tpu.dot_dimension_numbers<[1], [0], [0], [1], [0, 0, 1, 1], [], []>} : vector<8x128xf32>, vector<128x512xf32>, vector<8x512xf32> -> vector<8x512xf32>
    %199 = arith.addf %197, %198 : vector<8x512xf32>
    %200 = vector.extract_strided_slice %199 {offsets = [0, 0], sizes = [8, 128], strides = [1, 1]} : vector<8x512xf32> to vector<8x128xf32>
    %201 = arith.negf %200 : vector<8x128xf32>
    %202 = math.exp %201 : vector<8x128xf32>
    %cst_56 = arith.constant 1.000000e+00 : f32
    %203 = vector.broadcast %cst_56 : f32 to vector<8x128xf32>
    %204 = arith.addf %203, %202 : vector<8x128xf32>
    %205 = arith.divf %203, %204 : vector<8x128xf32>
    %206 = vector.extract_strided_slice %199 {offsets = [0, 128], sizes = [8, 128], strides = [1, 1]} : vector<8x512xf32> to vector<8x128xf32>
    %207 = arith.negf %206 : vector<8x128xf32>
    %208 = math.exp %207 : vector<8x128xf32>
    %cst_57 = arith.constant 1.000000e+00 : f32
    %209 = vector.broadcast %cst_57 : f32 to vector<8x128xf32>
    %210 = arith.addf %209, %208 : vector<8x128xf32>
    %211 = arith.divf %209, %210 : vector<8x128xf32>
    %212 = vector.extract_strided_slice %199 {offsets = [0, 256], sizes = [8, 128], strides = [1, 1]} : vector<8x512xf32> to vector<8x128xf32>
    %213 = math.tanh %212 : vector<8x128xf32>
    %214 = vector.extract_strided_slice %199 {offsets = [0, 384], sizes = [8, 128], strides = [1, 1]} : vector<8x512xf32> to vector<8x128xf32>
    %215 = arith.negf %214 : vector<8x128xf32>
    %216 = math.exp %215 : vector<8x128xf32>
    %cst_58 = arith.constant 1.000000e+00 : f32
    %217 = vector.broadcast %cst_58 : f32 to vector<8x128xf32>
    %218 = arith.addf %217, %216 : vector<8x128xf32>
    %219 = arith.divf %217, %218 : vector<8x128xf32>
    %220 = arith.mulf %211, %192 : vector<8x128xf32>
    %221 = arith.mulf %205, %213 : vector<8x128xf32>
    %222 = arith.addf %220, %221 : vector<8x128xf32>
    %223 = math.tanh %222 : vector<8x128xf32>
    %224 = arith.mulf %219, %223 : vector<8x128xf32>
    %c7_i32 = arith.constant 7 : i32
    %225 = arith.index_cast %c7_i32 : i32 to index
    %c0_59 = arith.constant 0 : index
    %c0_60 = arith.constant 0 : index
    %226 = vector.load %arg7[%225, %c0_59, %c0_60] : memref<8x8x512xf32, #tpu.memory_space<vmem>>, vector<1x8x512xf32>
    %227 = vector.shape_cast %226 : vector<1x8x512xf32> to vector<8x512xf32>
    %cst_61 = arith.constant dense<0.000000e+00> : vector<8x512xf32>
    %228 = tpu.matmul %224, %12, %cst_61 {dimension_numbers = #tpu.dot_dimension_numbers<[1], [0], [0], [1], [0, 0, 1, 1], [], []>} : vector<8x128xf32>, vector<128x512xf32>, vector<8x512xf32> -> vector<8x512xf32>
    %229 = arith.addf %227, %228 : vector<8x512xf32>
    %230 = vector.extract_strided_slice %229 {offsets = [0, 0], sizes = [8, 128], strides = [1, 1]} : vector<8x512xf32> to vector<8x128xf32>
    %231 = arith.negf %230 : vector<8x128xf32>
    %232 = math.exp %231 : vector<8x128xf32>
    %cst_62 = arith.constant 1.000000e+00 : f32
    %233 = vector.broadcast %cst_62 : f32 to vector<8x128xf32>
    %234 = arith.addf %233, %232 : vector<8x128xf32>
    %235 = arith.divf %233, %234 : vector<8x128xf32>
    %236 = vector.extract_strided_slice %229 {offsets = [0, 128], sizes = [8, 128], strides = [1, 1]} : vector<8x512xf32> to vector<8x128xf32>
    %237 = arith.negf %236 : vector<8x128xf32>
    %238 = math.exp %237 : vector<8x128xf32>
    %cst_63 = arith.constant 1.000000e+00 : f32
    %239 = vector.broadcast %cst_63 : f32 to vector<8x128xf32>
    %240 = arith.addf %239, %238 : vector<8x128xf32>
    %241 = arith.divf %239, %240 : vector<8x128xf32>
    %242 = vector.extract_strided_slice %229 {offsets = [0, 256], sizes = [8, 128], strides = [1, 1]} : vector<8x512xf32> to vector<8x128xf32>
    %243 = math.tanh %242 : vector<8x128xf32>
    %244 = vector.extract_strided_slice %229 {offsets = [0, 384], sizes = [8, 128], strides = [1, 1]} : vector<8x512xf32> to vector<8x128xf32>
    %245 = arith.negf %244 : vector<8x128xf32>
    %246 = math.exp %245 : vector<8x128xf32>
    %cst_64 = arith.constant 1.000000e+00 : f32
    %247 = vector.broadcast %cst_64 : f32 to vector<8x128xf32>
    %248 = arith.addf %247, %246 : vector<8x128xf32>
    %249 = arith.divf %247, %248 : vector<8x128xf32>
    %250 = arith.mulf %241, %222 : vector<8x128xf32>
    %251 = arith.mulf %235, %243 : vector<8x128xf32>
    %252 = arith.addf %250, %251 : vector<8x128xf32>
    %253 = math.tanh %252 : vector<8x128xf32>
    %254 = arith.mulf %249, %253 : vector<8x128xf32>
    %c8_i32 = arith.constant 8 : i32
    %c0_65 = arith.constant 0 : index
    %c0_66 = arith.constant 0 : index
    %255 = vector.load %arg5[%c0_65, %c0_66] : memref<8x128xf32, #tpu.memory_space<vmem>>, vector<8x128xf32>
    tpu.vector_store %arg5[%c0_65, %c0_66], %254 {strides = array<i32>} : memref<8x128xf32, #tpu.memory_space<vmem>>, vector<8x128xf32>,
    %c0_67 = arith.constant 0 : index
    %c0_68 = arith.constant 0 : index
    %256 = vector.load %arg6[%c0_67, %c0_68] : memref<8x128xf32, #tpu.memory_space<vmem>>, vector<8x128xf32>
    tpu.vector_store %arg6[%c0_67, %c0_68], %252 {strides = array<i32>} : memref<8x128xf32, #tpu.memory_space<vmem>>, vector<8x128xf32>,
    return
  }
  func.func @transform_0(%arg0: i32) -> (i32, i32, i32) {
    %c0_i32 = arith.constant 0 : i32
    %c0_i32_0 = arith.constant 0 : i32
    %c0_i32_1 = arith.constant 0 : i32
    return %arg0, %c0_i32, %c0_i32_0 : i32, i32, i32
  }
  func.func @transform_1(%arg0: i32) -> (i32, i32) {
    %c0_i32 = arith.constant 0 : i32
    %c0_i32_0 = arith.constant 0 : i32
    %c0_i32_1 = arith.constant 0 : i32
    return %c0_i32, %c0_i32_0 : i32, i32
  }
  func.func @transform_2(%arg0: i32) -> (i32, i32) {
    %c0_i32 = arith.constant 0 : i32
    %c0_i32_0 = arith.constant 0 : i32
    %c0_i32_1 = arith.constant 0 : i32
    return %c0_i32, %c0_i32_0 : i32, i32
  }
  func.func @transform_3(%arg0: i32) -> (i32, i32) {
    %c0_i32 = arith.constant 0 : i32
    %c0_i32_0 = arith.constant 0 : i32
    %c0_i32_1 = arith.constant 0 : i32
    return %c0_i32, %c0_i32_0 : i32, i32
  }
  func.func @transform_4(%arg0: i32) -> (i32, i32) {
    %c0_i32 = arith.constant 0 : i32
    %c0_i32_0 = arith.constant 0 : i32
    %c0_i32_1 = arith.constant 0 : i32
    return %c0_i32, %c0_i32_0 : i32, i32
  }
  func.func @transform_5(%arg0: i32) -> (i32, i32) {
    %c0_i32 = arith.constant 0 : i32
    %c0_i32_0 = arith.constant 0 : i32
    %c0_i32_1 = arith.constant 0 : i32
    return %c0_i32, %c0_i32_0 : i32, i32
  }
}

</mosaic_0001>

<llo_original>
// kernel: tpu_custom_call.1
$region0: #{tpu_custom_call.1}
  #allocation0 [shape = 'u32[]', space=smem, size = 0x4, offset = 0x4, fixed_abs, tag = 'smem constant byte address 0x4 - core index']
  #allocation1 [shape = 'u32[144,128]{1,0:T(1,128)}', space=vmem, size = 0x12000, scoped, tag = 'internal scratch']
  #allocation2 [shape = 'f32[8,8,512]{2,1,0:T(8,128)}', space=vmem, size = 0x20000, scoped, tag = 'scratch operand']
  %s0 = inlined_call_operand.hbm [shape: f32[8,8,16], index: 0, kind: input, shape index: {}]
  %s1 = inlined_call_operand.hbm [shape: f32[16,512], index: 1, kind: input, shape index: {}]
  %s2 = inlined_call_operand.hbm [shape: f32[128,512], index: 2, kind: input, shape index: {}]
  %s3 = inlined_call_operand.vmem [shape: f32[1,512], index: 3, kind: input, shape index: {}]
  %s4 = inlined_call_operand.hbm [shape: f32[8,128], index: 4, kind: output, shape index: {0}]
  %s5 = inlined_call_operand.hbm [shape: f32[8,128], index: 5, kind: output, shape index: {1}]
  %6 = xla_tuple %s4, %s5
  %s7 = sld [smem:[#allocation0]]
  $region50: #{tpu_custom_call.1} parent=0
    _
  %s9 = ssub.s32 1, %s7
  %s10 = scalar_select 0, %s9, %s7
  $region1: #{tpu_custom_call.1} parent=0
    #allocation3 [shape = 'u8[32768]{0}', space=vmem, size = 0x8000, scoped, tag = 'input window, operand 0, single buffered']
    #allocation4 [shape = 's32[1]{0}', space=sflag, size = 0x4, scoped, tag = 'scoped memory for tpu_custom_call.1']
    #allocation5 [shape = 's32[1]{0}', space=sflag, size = 0x4, scoped, tag = 'scoped memory for tpu_custom_call.1']
    #allocation6 [shape = 'u8[32768]{0}', space=vmem, size = 0x8000, scoped, tag = 'input window, operand 1, single buffered']
    #allocation7 [shape = 's32[1]{0}', space=sflag, size = 0x4, scoped, tag = 'scoped memory for tpu_custom_call.1']
    #allocation8 [shape = 'u8[262144]{0}', space=vmem, size = 0x40000, scoped, tag = 'input window, operand 2, single buffered']
    #allocation9 [shape = 'u8[4096]{0}', space=vmem, size = 0x1000, scoped, tag = 'output window, operand 0, single buffered']
    #allocation10 [shape = 'u8[4096]{0}', space=vmem, size = 0x1000, scoped, tag = 'output window, operand 1, single buffered']
    #allocation11 [shape = 's32[1]{0}', space=sflag, size = 0x4, scoped, tag = 'scoped memory for tpu_custom_call.1']
    %11 = vsyncpa [#allocation4], 0
    %12 = vsyncpa [#allocation7], 0
    %13 = vsyncpa [#allocation5], 0
    %14 = vsyncpa [#allocation11], 0
    // Predicated region
    $region2: #{tpu_custom_call.1} parent=1 // pred_check
      _
    $region3: #{tpu_custom_call.1} parent=1 // pred_check_branch
      %16 = sbr.rel (0) target = $region5
    $region4: #{tpu_custom_call.1} parent=1 // pred_region
      %s18 = ssub.s32 1024, 1024
      %19 = vsyncadd [#allocation4], %s18
      %s20 = sshll.u32 [#allocation3], 4
      %s21 = int_to_ptr.vmem [resolvable:$true] %s20
      %26 = dma.hbm_to_vmem [thread:$0]  %s0, 1024, %s21, [#allocation4], 128, 128, 8
    $region5: #{tpu_custom_call.1} parent=1 // pred_fallthru
      _
    // Predicated region
    $region6: #{tpu_custom_call.1} parent=1 // pred_check
      _
    $region7: #{tpu_custom_call.1} parent=1 // pred_check_branch
      %28 = sbr.rel (0) target = $region9
    $region8: #{tpu_custom_call.1} parent=1 // pred_region
      %s30 = ssub.s32 1024, 1024
      %31 = vsyncadd [#allocation7], %s30
      %s32 = sshll.u32 [#allocation6], 4
      %s33 = int_to_ptr.vmem [resolvable:$true] %s32
      %38 = dma.hbm_to_vmem [thread:$0]  %s1, 1024, %s33, [#allocation7], 512, 512, 32
    $region9: #{tpu_custom_call.1} parent=1 // pred_fallthru
      _
    // Predicated region
    $region10: #{tpu_custom_call.1} parent=1 // pred_check
      _
    $region11: #{tpu_custom_call.1} parent=1 // pred_check_branch
      %40 = sbr.rel (0) target = $region13
    $region12: #{tpu_custom_call.1} parent=1 // pred_region
      %s42 = ssub.s32 8192, 8192
      %43 = vsyncadd [#allocation7], %s42
      %s44 = sshll.u32 [#allocation8], 4
      %s45 = int_to_ptr.vmem [resolvable:$true] %s44
      %50 = dma.hbm_to_vmem [thread:$0]  %s2, 8192, %s45, [#allocation7], 512, 512, 32
    $region13: #{tpu_custom_call.1} parent=1 // pred_fallthru
      _
    // Predicated region
    $region14: #{tpu_custom_call.1} parent=1 // pred_check
      _
    $region15: #{tpu_custom_call.1} parent=1 // pred_check_branch
      %52 = sbr.rel (0) target = $region17
    $region16: #{tpu_custom_call.1} parent=1 // pred_region
      _
    $region17: #{tpu_custom_call.1} parent=1 // pred_fallthru
      _
    // Predicated region
    $region18: #{tpu_custom_call.1} parent=1 // pred_check
      _
    $region19: #{tpu_custom_call.1} parent=1 // pred_check_branch
      %54 = sbr.rel (0) target = $region21
    $region20: #{tpu_custom_call.1} parent=1 // pred_region
      %55 = dma.done [#allocation4], 1024
    $region21: #{tpu_custom_call.1} parent=1 // pred_fallthru
      _
    // Predicated region
    $region22: #{tpu_custom_call.1} parent=1 // pred_check
      _
    $region23: #{tpu_custom_call.1} parent=1 // pred_check_branch
      %57 = sbr.rel (0) target = $region25
    $region24: #{tpu_custom_call.1} parent=1 // pred_region
      %58 = dma.done [#allocation7], 1024
    $region25: #{tpu_custom_call.1} parent=1 // pred_fallthru
      _
    // Predicated region
    $region26: #{tpu_custom_call.1} parent=1 // pred_check
      _
    $region27: #{tpu_custom_call.1} parent=1 // pred_check_branch
      %60 = sbr.rel (0) target = $region29
    $region28: #{tpu_custom_call.1} parent=1 // pred_region
      %61 = dma.done [#allocation7], 8192
    $region29: #{tpu_custom_call.1} parent=1 // pred_fallthru
      _
    %p62 = scmp.eq.s32.totalorder 0, 0
    // Predicated region
    $region30: #{tpu_custom_call.1} parent=1 // pred_check
      %p63 = pneg %p62
    $region31: #{tpu_custom_call.1} parent=1 // pred_check_branch
      %65 = sbr.rel (%p63) target = $region33
    $region32: #{tpu_custom_call.1} parent=1 // pred_region
      %66 = vst [vmem:[#allocation9] sm:$0xff] 0.0
      %67 = vst [vmem:[#allocation10] sm:$0xff] 0.0
    $region33: #{tpu_custom_call.1} parent=1 // pred_fallthru
      _
    %v68 = vld [vmem:[#allocation3] sm:$0xff]
    %v69 = vld [vmem:[#allocation3 + $0x8] sm:$0xff]
    %v70 = vld [vmem:[#allocation3 + $0x10] sm:$0xff]
    %v71 = vld [vmem:[#allocation3 + $0x18] sm:$0xff]
    %v72 = vld [vmem:[#allocation3 + $0x20] sm:$0xff]
    %v73 = vld [vmem:[#allocation3 + $0x28] sm:$0xff]
    %v74 = vld [vmem:[#allocation3 + $0x30] sm:$0xff]
    %v75 = vld [vmem:[#allocation3 + $0x38] sm:$0xff]
    %v76 = vld [vmem:[#allocation6] sm:$0xff]
    %v77 = vld [vmem:[#allocation6 + $0x8] sm:$0xff]
    %v78 = vld [vmem:[#allocation6 + $0x10] sm:$0xff]
    %v79 = vld [vmem:[#allocation6 + $0x18] sm:$0xff]
    %v80 = vld [vmem:[#allocation6 + $0x20] sm:$0xff]
    %v81 = vld [vmem:[#allocation6 + $0x28] sm:$0xff]
    %v82 = vld [vmem:[#allocation6 + $0x30] sm:$0xff]
    %v83 = vld [vmem:[#allocation6 + $0x38] sm:$0xff]
    %v84 = vld [vmem:[%s3] sm:$0xf]
    %v86 = vlaneseq
    %v87 = vshrl.u32 %v86, 7
    %v88 = vsub.s32 0, %v87
    %v89 = vrot.slane %v84, %v88
    %v90 = vlaneseq
    %v91 = vshrl.u32 %v90, 7
    %v92 = vsub.s32 1, %v91
    %v93 = vrot.slane %v84, %v92
    %v94 = vlaneseq
    %v95 = vshrl.u32 %v94, 7
    %v96 = vsub.s32 2, %v95
    %v97 = vrot.slane %v84, %v96
    %v98 = vlaneseq
    %v99 = vshrl.u32 %v98, 7
    %v100 = vsub.s32 3, %v99
    %v101 = vrot.slane %v84, %v100
    %vm106 = vcmask 130048
    %v108 = vsel %vm106, %v68, 0
    %v111 = vsel %vm106, %v69, 0
    %v114 = vsel %vm106, %v70, 0
    %v117 = vsel %vm106, %v71, 0
    %v120 = vsel %vm106, %v72, 0
    %v123 = vsel %vm106, %v73, 0
    %v126 = vsel %vm106, %v74, 0
    %v129 = vsel %vm106, %v75, 0
    %131 = vmatprep.subr.mxu0 0.0
    %132 = vmatpush1.msra.mxu0 0.0
    %133 = vmatprep.subr.mxu0 0.0
    %134 = vmatpush1.msra.mxu0 0.0
    %135 = vmatprep.subr.mxu0 0.0
    %136 = vmatpush1.msra.mxu0 0.0
    %137 = vmatprep.subr.mxu0 0.0
    %138 = vmatpush1.msra.mxu0 0.0
    %139 = vmatprep.subr.mxu0 0.0
    %140 = vmatpush1.msra.mxu0 0.0
    %141 = vmatprep.subr.mxu0 0.0
    %142 = vmatpush1.msra.mxu0 0.0
    %143 = vmatprep.subr.mxu0 0.0
    %144 = vmatpush1.msra.mxu0 0.0
    %145 = vmatprep.subr.mxu0 0.0
    %146 = vmatpush1.msra.mxu0 0.0
    %147 = vmatprep.subr.mxu0 0.0
    %148 = vmatpush1.msra.mxu0 0.0
    %149 = vmatprep.subr.mxu0 0.0
    %150 = vmatpush1.msra.mxu0 0.0
    %151 = vmatprep.subr.mxu0 0.0
    %152 = vmatpush1.msra.mxu0 0.0
    %153 = vmatprep.subr.mxu0 0.0
    %154 = vmatpush1.msra.mxu0 0.0
    %155 = vmatprep.subr.mxu0 0.0
    %156 = vmatpush1.msra.mxu0 0.0
    %157 = vmatprep.subr.mxu0 0.0
    %158 = vmatpush1.msra.mxu0 0.0
    %159 = vmatprep.subr.mxu0 %v81
    %160 = vmatpush1.msra.mxu0 %v80
    %161 = vmatprep.subr.mxu0 %v77
    %162 = vmatpush1.msra.mxu0 %v76
    %163 = vmatprep.subr.mxu0 0.0
    %164 = vmatpush2.msra.mxu0 0.0
    %165 = vmatprep.subr.mxu0 0.0
    %166 = vmatpush2.msra.mxu0 0.0
    %167 = vmatprep.subr.mxu0 0.0
    %168 = vmatpush2.msra.mxu0 0.0
    %169 = vmatprep.subr.mxu0 0.0
    %170 = vmatpush2.msra.mxu0 0.0
    %171 = vmatprep.subr.mxu0 0.0
    %172 = vmatpush2.msra.mxu0 0.0
    %173 = vmatprep.subr.mxu0 0.0
    %174 = vmatpush2.msra.mxu0 0.0
    %175 = vmatprep.subr.mxu0 0.0
    %176 = vmatpush2.msra.mxu0 0.0
    %177 = vmatprep.subr.mxu0 0.0
    %178 = vmatpush2.msra.mxu0 0.0
    %179 = vmatprep.subr.mxu0 0.0
    %180 = vmatpush2.msra.mxu0 0.0
    %181 = vmatprep.subr.mxu0 0.0
    %182 = vmatpush2.msra.mxu0 0.0
    %183 = vmatprep.subr.mxu0 0.0
    %184 = vmatpush2.msra.mxu0 0.0
    %185 = vmatprep.subr.mxu0 0.0
    %186 = vmatpush2.msra.mxu0 0.0
    %187 = vmatprep.subr.mxu0 0.0
    %188 = vmatpush2.msra.mxu0 0.0
    %189 = vmatprep.subr.mxu0 0.0
    %190 = vmatpush2.msra.mxu0 0.0
    %191 = vmatprep.subr.mxu0 0.0
    %192 = vmatpush2.msra.mxu0 0.0
    %193 = vmatprep.subr.mxu0 0.0
    %194 = vmatpush2.msra.mxu0 0.0
    %195 = vmatprep.mubr.f32.mxu0 0.0
    %196 = vmatmul.mubr.f32.gmra.mxu0 %v108
    %v197 = vpop.f32.mrf.mxu0
    %v198 = vadd.f32 %v89, %v197
    %v199 = vpop.f32.mrf.mxu0
    %v200 = vadd.f32 %v93, %v199
    %201 = vmatprep.mubr.f32.mxu0 0.0
    %202 = vmatmul.mubr.f32.gmra.mxu0 %v111
    %v203 = vpop.f32.mrf.mxu0
    %v204 = vadd.f32 %v89, %v203
    %v205 = vpop.f32.mrf.mxu0
    %v206 = vadd.f32 %v93, %v205
    %207 = vmatprep.mubr.f32.mxu0 0.0
    %208 = vmatmul.mubr.f32.gmra.mxu0 %v114
    %v209 = vpop.f32.mrf.mxu0
    %v210 = vadd.f32 %v89, %v209
    %v211 = vpop.f32.mrf.mxu0
    %v212 = vadd.f32 %v93, %v211
    %213 = vmatprep.mubr.f32.mxu0 0.0
    %214 = vmatmul.mubr.f32.gmra.mxu0 %v117
    %v215 = vpop.f32.mrf.mxu0
    %v216 = vadd.f32 %v89, %v215
    %v217 = vpop.f32.mrf.mxu0
    %v218 = vadd.f32 %v93, %v217
    %219 = vmatprep.mubr.f32.mxu0 0.0
    %220 = vmatmul.mubr.f32.gmra.mxu0 %v120
    %v221 = vpop.f32.mrf.mxu0
    %v222 = vadd.f32 %v89, %v221
    %v223 = vpop.f32.mrf.mxu0
    %v224 = vadd.f32 %v93, %v223
    %225 = vmatprep.mubr.f32.mxu0 0.0
    %226 = vmatmul.mubr.f32.gmra.mxu0 %v123
    %v227 = vpop.f32.mrf.mxu0
    %v228 = vadd.f32 %v89, %v227
    %v229 = vpop.f32.mrf.mxu0
    %v230 = vadd.f32 %v93, %v229
    %231 = vmatprep.mubr.f32.mxu0 0.0
    %232 = vmatmul.mubr.f32.gmra.mxu0 %v126
    %v233 = vpop.f32.mrf.mxu0
    %v234 = vadd.f32 %v89, %v233
    %v235 = vpop.f32.mrf.mxu0
    %v236 = vadd.f32 %v93, %v235
    %237 = vmatprep.mubr.f32.mxu0 0.0
    %238 = vmatmul.mubr.f32.gmra.mxu0 %v129
    %v239 = vpop.f32.mrf.mxu0
    %v240 = vadd.f32 %v89, %v239
    %v241 = vpop.f32.mrf.mxu0
    %v242 = vadd.f32 %v93, %v241
    %243 = vdwg.mxu0
    %244 = vmatprep.subr.mxu0 0.0
    %245 = vmatpush1.msra.mxu0 0.0
    %246 = vmatprep.subr.mxu0 0.0
    %247 = vmatpush1.msra.mxu0 0.0
    %248 = vmatprep.subr.mxu0 0.0
    %249 = vmatpush1.msra.mxu0 0.0
    %250 = vmatprep.subr.mxu0 0.0
    %251 = vmatpush1.msra.mxu0 0.0
    %252 = vmatprep.subr.mxu0 0.0
    %253 = vmatpush1.msra.mxu0 0.0
    %254 = vmatprep.subr.mxu0 0.0
    %255 = vmatpush1.msra.mxu0 0.0
    %256 = vmatprep.subr.mxu0 0.0
    %257 = vmatpush1.msra.mxu0 0.0
    %258 = vmatprep.subr.mxu0 0.0
    %259 = vmatpush1.msra.mxu0 0.0
    %260 = vmatprep.subr.mxu0 0.0
    %261 = vmatpush1.msra.mxu0 0.0
    %262 = vmatprep.subr.mxu0 0.0
    %263 = vmatpush1.msra.mxu0 0.0
    %264 = vmatprep.subr.mxu0 0.0
    %265 = vmatpush1.msra.mxu0 0.0
    %266 = vmatprep.subr.mxu0 0.0
    %267 = vmatpush1.msra.mxu0 0.0
    %268 = vmatprep.subr.mxu0 0.0
    %269 = vmatpush1.msra.mxu0 0.0
    %270 = vmatprep.subr.mxu0 0.0
    %271 = vmatpush1.msra.mxu0 0.0
    %272 = vmatprep.subr.mxu0 %v83
    %273 = vmatpush1.msra.mxu0 %v82
    %274 = vmatprep.subr.mxu0 %v79
    %275 = vmatpush1.msra.mxu0 %v78
    %276 = vmatprep.subr.mxu0 0.0
    %277 = vmatpush2.msra.mxu0 0.0
    %278 = vmatprep.subr.mxu0 0.0
    %279 = vmatpush2.msra.mxu0 0.0
    %280 = vmatprep.subr.mxu0 0.0
    %281 = vmatpush2.msra.mxu0 0.0
    %282 = vmatprep.subr.mxu0 0.0
    %283 = vmatpush2.msra.mxu0 0.0
    %284 = vmatprep.subr.mxu0 0.0
    %285 = vmatpush2.msra.mxu0 0.0
    %286 = vmatprep.subr.mxu0 0.0
    %287 = vmatpush2.msra.mxu0 0.0
    %288 = vmatprep.subr.mxu0 0.0
    %289 = vmatpush2.msra.mxu0 0.0
    %290 = vmatprep.subr.mxu0 0.0
    %291 = vmatpush2.msra.mxu0 0.0
    %292 = vmatprep.subr.mxu0 0.0
    %293 = vmatpush2.msra.mxu0 0.0
    %294 = vmatprep.subr.mxu0 0.0
    %295 = vmatpush2.msra.mxu0 0.0
    %296 = vmatprep.subr.mxu0 0.0
    %297 = vmatpush2.msra.mxu0 0.0
    %298 = vmatprep.subr.mxu0 0.0
    %299 = vmatpush2.msra.mxu0 0.0
    %300 = vmatprep.subr.mxu0 0.0
    %301 = vmatpush2.msra.mxu0 0.0
    %302 = vmatprep.subr.mxu0 0.0
    %303 = vmatpush2.msra.mxu0 0.0
    %304 = vmatprep.subr.mxu0 0.0
    %305 = vmatpush2.msra.mxu0 0.0
    %306 = vmatprep.subr.mxu0 0.0
    %307 = vmatpush2.msra.mxu0 0.0
    %308 = vmatprep.mubr.f32.mxu0 0.0
    %309 = vmatmul.mubr.f32.gmra.mxu0 %v108
    %v310 = vpop.f32.mrf.mxu0
    %v311 = vadd.f32 %v97, %v310
    %v312 = vpop.f32.mrf.mxu0
    %v313 = vadd.f32 %v101, %v312
    %314 = vmatprep.mubr.f32.mxu0 0.0
    %315 = vmatmul.mubr.f32.gmra.mxu0 %v111
    %v316 = vpop.f32.mrf.mxu0
    %v317 = vadd.f32 %v97, %v316
    %v318 = vpop.f32.mrf.mxu0
    %v319 = vadd.f32 %v101, %v318
    %320 = vmatprep.mubr.f32.mxu0 0.0
    %321 = vmatmul.mubr.f32.gmra.mxu0 %v114
    %v322 = vpop.f32.mrf.mxu0
    %v323 = vadd.f32 %v97, %v322
    %v324 = vpop.f32.mrf.mxu0
    %v325 = vadd.f32 %v101, %v324
    %326 = vmatprep.mubr.f32.mxu0 0.0
    %327 = vmatmul.mubr.f32.gmra.mxu0 %v117
    %v328 = vpop.f32.mrf.mxu0
    %v329 = vadd.f32 %v97, %v328
    %v330 = vpop.f32.mrf.mxu0
    %v331 = vadd.f32 %v101, %v330
    %332 = vmatprep.mubr.f32.mxu0 0.0
    %333 = vmatmul.mubr.f32.gmra.mxu0 %v120
    %v334 = vpop.f32.mrf.mxu0
    %v335 = vadd.f32 %v97, %v334
    %v336 = vpop.f32.mrf.mxu0
    %v337 = vadd.f32 %v101, %v336
    %338 = vmatprep.mubr.f32.mxu0 0.0
    %339 = vmatmul.mubr.f32.gmra.mxu0 %v123
    %v340 = vpop.f32.mrf.mxu0
    %v341 = vadd.f32 %v97, %v340
    %v342 = vpop.f32.mrf.mxu0
    %v343 = vadd.f32 %v101, %v342
    %344 = vmatprep.mubr.f32.mxu0 0.0
    %345 = vmatmul.mubr.f32.gmra.mxu0 %v126
    %v346 = vpop.f32.mrf.mxu0
    %v347 = vadd.f32 %v97, %v346
    %v348 = vpop.f32.mrf.mxu0
    %v349 = vadd.f32 %v101, %v348
    %350 = vmatprep.mubr.f32.mxu0 0.0
    %351 = vmatmul.mubr.f32.gmra.mxu0 %v129
    %v352 = vpop.f32.mrf.mxu0
    %v353 = vadd.f32 %v97, %v352
    %v354 = vpop.f32.mrf.mxu0
    %v355 = vadd.f32 %v101, %v354
    %356 = vdwg.mxu0
    %357 = vst [vmem:[#allocation2] sm:$0xff] %v198
    %358 = vst [vmem:[#allocation2 + $0x8] sm:$0xff] %v200
    %359 = vst [vmem:[#allocation2 + $0x10] sm:$0xff] %v311
    %360 = vst [vmem:[#allocation2 + $0x18] sm:$0xff] %v313
    %361 = vst [vmem:[#allocation2 + $0x20] sm:$0xff] %v204
    %362 = vst [vmem:[#allocation2 + $0x28] sm:$0xff] %v206
    %363 = vst [vmem:[#allocation2 + $0x30] sm:$0xff] %v317
    %364 = vst [vmem:[#allocation2 + $0x38] sm:$0xff] %v319
    %365 = vst [vmem:[#allocation2 + $0x40] sm:$0xff] %v210
    %366 = vst [vmem:[#allocation2 + $0x48] sm:$0xff] %v212
    %367 = vst [vmem:[#allocation2 + $0x50] sm:$0xff] %v323
    %368 = vst [vmem:[#allocation2 + $0x58] sm:$0xff] %v325
    %369 = vst [vmem:[#allocation2 + $0x60] sm:$0xff] %v216
    %370 = vst [vmem:[#allocation2 + $0x68] sm:$0xff] %v218
    %371 = vst [vmem:[#allocation2 + $0x70] sm:$0xff] %v329
    %372 = vst [vmem:[#allocation2 + $0x78] sm:$0xff] %v331
    %373 = vst [vmem:[#allocation2 + $0x80] sm:$0xff] %v222
    %374 = vst [vmem:[#allocation2 + $0x88] sm:$0xff] %v224
    %375 = vst [vmem:[#allocation2 + $0x90] sm:$0xff] %v335
    %376 = vst [vmem:[#allocation2 + $0x98] sm:$0xff] %v337
    %377 = vst [vmem:[#allocation2 + $0xa0] sm:$0xff] %v228
    %378 = vst [vmem:[#allocation2 + $0xa8] sm:$0xff] %v230
    %379 = vst [vmem:[#allocation2 + $0xb0] sm:$0xff] %v341
    %380 = vst [vmem:[#allocation2 + $0xb8] sm:$0xff] %v343
    %381 = vst [vmem:[#allocation2 + $0xc0] sm:$0xff] %v234
    %382 = vst [vmem:[#allocation2 + $0xc8] sm:$0xff] %v236
    %383 = vst [vmem:[#allocation2 + $0xd0] sm:$0xff] %v347
    %384 = vst [vmem:[#allocation2 + $0xd8] sm:$0xff] %v349
    %385 = vst [vmem:[#allocation2 + $0xe0] sm:$0xff] %v240
    %386 = vst [vmem:[#allocation2 + $0xe8] sm:$0xff] %v242
    %387 = vst [vmem:[#allocation2 + $0xf0] sm:$0xff] %v353
    %388 = vst [vmem:[#allocation2 + $0xf8] sm:$0xff] %v355
    %v389 = vld [vmem:[#allocation8] sm:$0xff]
    %v390 = vld [vmem:[#allocation8 + $0x8] sm:$0xff]
    %v391 = vld [vmem:[#allocation8 + $0x10] sm:$0xff]
    %v392 = vld [vmem:[#allocation8 + $0x18] sm:$0xff]
    %v393 = vld [vmem:[#allocation8 + $0x20] sm:$0xff]
    %v394 = vld [vmem:[#allocation8 + $0x28] sm:$0xff]
    %v395 = vld [vmem:[#allocation8 + $0x30] sm:$0xff]
    %v396 = vld [vmem:[#allocation8 + $0x38] sm:$0xff]
    %v397 = vld [vmem:[#allocation8 + $0x40] sm:$0xff]
    %v398 = vld [vmem:[#allocation8 + $0x48] sm:$0xff]
    %v399 = vld [vmem:[#allocation8 + $0x50] sm:$0xff]
    %v400 = vld [vmem:[#allocation8 + $0x58] sm:$0xff]
    %v401 = vld [vmem:[#allocation8 + $0x60] sm:$0xff]
    %v402 = vld [vmem:[#allocation8 + $0x68] sm:$0xff]
    %v403 = vld [vmem:[#allocation8 + $0x70] sm:$0xff]
    %v404 = vld [vmem:[#allocation8 + $0x78] sm:$0xff]
    %v405 = vld [vmem:[#allocation8 + $0x80] sm:$0xff]
    %v406 = vld [vmem:[#allocation8 + $0x88] sm:$0xff]
    %v407 = vld [vmem:[#allocation8 + $0x90] sm:$0xff]
    %v408 = vld [vmem:[#allocation8 + $0x98] sm:$0xff]
    %v409 = vld [vmem:[#allocation8 + $0xa0] sm:$0xff]
    %v410 = vld [vmem:[#allocation8 + $0xa8] sm:$0xff]
    %v411 = vld [vmem:[#allocation8 + $0xb0] sm:$0xff]
    %v412 = vld [vmem:[#allocation8 + $0xb8] sm:$0xff]
    %v413 = vld [vmem:[#allocation8 + $0xc0] sm:$0xff]
    %v414 = vld [vmem:[#allocation8 + $0xc8] sm:$0xff]
    %v415 = vld [vmem:[#allocation8 + $0xd0] sm:$0xff]
    %v416 = vld [vmem:[#allocation8 + $0xd8] sm:$0xff]
    %v417 = vld [vmem:[#allocation8 + $0xe0] sm:$0xff]
    %v418 = vld [vmem:[#allocation8 + $0xe8] sm:$0xff]
    %v419 = vld [vmem:[#allocation8 + $0xf0] sm:$0xff]
    %v420 = vld [vmem:[#allocation8 + $0xf8] sm:$0xff]
    %v421 = vld [vmem:[#allocation8 + $0x100] sm:$0xff]
    %v422 = vld [vmem:[#allocation8 + $0x108] sm:$0xff]
    %v423 = vld [vmem:[#allocation8 + $0x110] sm:$0xff]
    %v424 = vld [vmem:[#allocation8 + $0x118] sm:$0xff]
    %v425 = vld [vmem:[#allocation8 + $0x120] sm:$0xff]
    %v426 = vld [vmem:[#allocation8 + $0x128] sm:$0xff]
    %v427 = vld [vmem:[#allocation8 + $0x130] sm:$0xff]
    %v428 = vld [vmem:[#allocation8 + $0x138] sm:$0xff]
    %v429 = vld [vmem:[#allocation8 + $0x140] sm:$0xff]
    %v430 = vld [vmem:[#allocation8 + $0x148] sm:$0xff]
    %v431 = vld [vmem:[#allocation8 + $0x150] sm:$0xff]
    %v432 = vld [vmem:[#allocation8 + $0x158] sm:$0xff]
    %v433 = vld [vmem:[#allocation8 + $0x160] sm:$0xff]
    %v434 = vld [vmem:[#allocation8 + $0x168] sm:$0xff]
    %v435 = vld [vmem:[#allocation8 + $0x170] sm:$0xff]
    %v436 = vld [vmem:[#allocation8 + $0x178] sm:$0xff]
    %v437 = vld [vmem:[#allocation8 + $0x180] sm:$0xff]
    %v438 = vld [vmem:[#allocation8 + $0x188] sm:$0xff]
    %v439 = vld [vmem:[#allocation8 + $0x190] sm:$0xff]
    %v440 = vld [vmem:[#allocation8 + $0x198] sm:$0xff]
    %v441 = vld [vmem:[#allocation8 + $0x1a0] sm:$0xff]
    %v442 = vld [vmem:[#allocation8 + $0x1a8] sm:$0xff]
    %v443 = vld [vmem:[#allocation8 + $0x1b0] sm:$0xff]
    %v444 = vld [vmem:[#allocation8 + $0x1b8] sm:$0xff]
    %v445 = vld [vmem:[#allocation8 + $0x1c0] sm:$0xff]
    %v446 = vld [vmem:[#allocation8 + $0x1c8] sm:$0xff]
    %v447 = vld [vmem:[#allocation8 + $0x1d0] sm:$0xff]
    %v448 = vld [vmem:[#allocation8 + $0x1d8] sm:$0xff]
    %v449 = vld [vmem:[#allocation8 + $0x1e0] sm:$0xff]
    %v450 = vld [vmem:[#allocation8 + $0x1e8] sm:$0xff]
    %v451 = vld [vmem:[#allocation8 + $0x1f0] sm:$0xff]
    %v452 = vld [vmem:[#allocation8 + $0x1f8] sm:$0xff]
    %v453 = vld [vmem:[#allocation9] sm:$0xff]
    %v454 = vld [vmem:[#allocation10] sm:$0xff]
    %v455 = vld [vmem:[#allocation2] sm:$0xff]
    %v456 = vld [vmem:[#allocation2 + $0x8] sm:$0xff]
    %v457 = vld [vmem:[#allocation2 + $0x10] sm:$0xff]
    %v458 = vld [vmem:[#allocation2 + $0x18] sm:$0xff]
    %459 = vmatprep.subr.mxu0 %v450
    %460 = vmatpush1.msra.mxu0 %v449
    %461 = vmatprep.subr.mxu0 %v446
    %462 = vmatpush1.msra.mxu0 %v445
    %463 = vmatprep.subr.mxu0 %v442
    %464 = vmatpush1.msra.mxu0 %v441
    %465 = vmatprep.subr.mxu0 %v438
    %466 = vmatpush1.msra.mxu0 %v437
    %467 = vmatprep.subr.mxu0 %v434
    %468 = vmatpush1.msra.mxu0 %v433
    %469 = vmatprep.subr.mxu0 %v430
    %470 = vmatpush1.msra.mxu0 %v429
    %471 = vmatprep.subr.mxu0 %v426
    %472 = vmatpush1.msra.mxu0 %v425
    %473 = vmatprep.subr.mxu0 %v422
    %474 = vmatpush1.msra.mxu0 %v421
    %475 = vmatprep.subr.mxu0 %v418
    %476 = vmatpush1.msra.mxu0 %v417
    %477 = vmatprep.subr.mxu0 %v414
    %478 = vmatpush1.msra.mxu0 %v413
    %479 = vmatprep.subr.mxu0 %v410
    %480 = vmatpush1.msra.mxu0 %v409
    %481 = vmatprep.subr.mxu0 %v406
    %482 = vmatpush1.msra.mxu0 %v405
    %483 = vmatprep.subr.mxu0 %v402
    %484 = vmatpush1.msra.mxu0 %v401
    %485 = vmatprep.subr.mxu0 %v398
    %486 = vmatpush1.msra.mxu0 %v397
    %487 = vmatprep.subr.mxu0 %v394
    %488 = vmatpush1.msra.mxu0 %v393
    %489 = vmatprep.subr.mxu0 %v390
    %490 = vmatpush1.msra.mxu0 %v389
    %491 = vmatprep.subr.mxu0 0.0
    %492 = vmatpush2.msra.mxu0 0.0
    %493 = vmatprep.subr.mxu0 0.0
    %494 = vmatpush2.msra.mxu0 0.0
    %495 = vmatprep.subr.mxu0 0.0
    %496 = vmatpush2.msra.mxu0 0.0
    %497 = vmatprep.subr.mxu0 0.0
    %498 = vmatpush2.msra.mxu0 0.0
    %499 = vmatprep.subr.mxu0 0.0
    %500 = vmatpush2.msra.mxu0 0.0
    %501 = vmatprep.subr.mxu0 0.0
    %502 = vmatpush2.msra.mxu0 0.0
    %503 = vmatprep.subr.mxu0 0.0
    %504 = vmatpush2.msra.mxu0 0.0
    %505 = vmatprep.subr.mxu0 0.0
    %506 = vmatpush2.msra.mxu0 0.0
    %507 = vmatprep.subr.mxu0 0.0
    %508 = vmatpush2.msra.mxu0 0.0
    %509 = vmatprep.subr.mxu0 0.0
    %510 = vmatpush2.msra.mxu0 0.0
    %511 = vmatprep.subr.mxu0 0.0
    %512 = vmatpush2.msra.mxu0 0.0
    %513 = vmatprep.subr.mxu0 0.0
    %514 = vmatpush2.msra.mxu0 0.0
    %515 = vmatprep.subr.mxu0 0.0
    %516 = vmatpush2.msra.mxu0 0.0
    %517 = vmatprep.subr.mxu0 0.0
    %518 = vmatpush2.msra.mxu0 0.0
    %519 = vmatprep.subr.mxu0 0.0
    %520 = vmatpush2.msra.mxu0 0.0
    %521 = vmatprep.subr.mxu0 0.0
    %522 = vmatpush2.msra.mxu0 0.0
    %523 = vmatprep.mubr.f32.mxu0 0.0
    %524 = vmatmul.mubr.f32.gmra.mxu0 %v453
    %v525 = vpop.f32.mrf.mxu0
    %v526 = vadd.f32 0.0, %v525
    %v527 = vpop.f32.mrf.mxu0
    %v528 = vadd.f32 0.0, %v527
    %529 = vdwg.mxu0
    %530 = vmatprep.subr.mxu0 %v452
    %531 = vmatpush1.msra.mxu0 %v451
    %532 = vmatprep.subr.mxu0 %v448
    %533 = vmatpush1.msra.mxu0 %v447
    %534 = vmatprep.subr.mxu0 %v444
    %535 = vmatpush1.msra.mxu0 %v443
    %536 = vmatprep.subr.mxu0 %v440
    %537 = vmatpush1.msra.mxu0 %v439
    %538 = vmatprep.subr.mxu0 %v436
    %539 = vmatpush1.msra.mxu0 %v435
    %540 = vmatprep.subr.mxu0 %v432
    %541 = vmatpush1.msra.mxu0 %v431
    %542 = vmatprep.subr.mxu0 %v428
    %543 = vmatpush1.msra.mxu0 %v427
    %544 = vmatprep.subr.mxu0 %v424
    %545 = vmatpush1.msra.mxu0 %v423
    %546 = vmatprep.subr.mxu0 %v420
    %547 = vmatpush1.msra.mxu0 %v419
    %548 = vmatprep.subr.mxu0 %v416
    %549 = vmatpush1.msra.mxu0 %v415
    %550 = vmatprep.subr.mxu0 %v412
    %551 = vmatpush1.msra.mxu0 %v411
    %552 = vmatprep.subr.mxu0 %v408
    %553 = vmatpush1.msra.mxu0 %v407
    %554 = vmatprep.subr.mxu0 %v404
    %555 = vmatpush1.msra.mxu0 %v403
    %556 = vmatprep.subr.mxu0 %v400
    %557 = vmatpush1.msra.mxu0 %v399
    %558 = vmatprep.subr.mxu0 %v396
    %559 = vmatpush1.msra.mxu0 %v395
    %560 = vmatprep.subr.mxu0 %v392
    %561 = vmatpush1.msra.mxu0 %v391
    %562 = vmatprep.subr.mxu0 0.0
    %563 = vmatpush2.msra.mxu0 0.0
    %564 = vmatprep.subr.mxu0 0.0
    %565 = vmatpush2.msra.mxu0 0.0
    %566 = vmatprep.subr.mxu0 0.0
    %567 = vmatpush2.msra.mxu0 0.0
    %568 = vmatprep.subr.mxu0 0.0
    %569 = vmatpush2.msra.mxu0 0.0
    %570 = vmatprep.subr.mxu0 0.0
    %571 = vmatpush2.msra.mxu0 0.0
    %572 = vmatprep.subr.mxu0 0.0
    %573 = vmatpush2.msra.mxu0 0.0
    %574 = vmatprep.subr.mxu0 0.0
    %575 = vmatpush2.msra.mxu0 0.0
    %576 = vmatprep.subr.mxu0 0.0
    %577 = vmatpush2.msra.mxu0 0.0
    %578 = vmatprep.subr.mxu0 0.0
    %579 = vmatpush2.msra.mxu0 0.0
    %580 = vmatprep.subr.mxu0 0.0
    %581 = vmatpush2.msra.mxu0 0.0
    %582 = vmatprep.subr.mxu0 0.0
    %583 = vmatpush2.msra.mxu0 0.0
    %584 = vmatprep.subr.mxu0 0.0
    %585 = vmatpush2.msra.mxu0 0.0
    %586 = vmatprep.subr.mxu0 0.0
    %587 = vmatpush2.msra.mxu0 0.0
    %588 = vmatprep.subr.mxu0 0.0
    %589 = vmatpush2.msra.mxu0 0.0
    %590 = vmatprep.subr.mxu0 0.0
    %591 = vmatpush2.msra.mxu0 0.0
    %592 = vmatprep.subr.mxu0 0.0
    %593 = vmatpush2.msra.mxu0 0.0
    %594 = vmatprep.mubr.f32.mxu0 0.0
    %595 = vmatmul.mubr.f32.gmra.mxu0 %v453
    %v596 = vpop.f32.mrf.mxu0
    %v597 = vadd.f32 0.0, %v596
    %v598 = vpop.f32.mrf.mxu0
    %v599 = vadd.f32 0.0, %v598
    %600 = vdwg.mxu0
    %v601 = vadd.f32 %v455, %v526
    %v602 = vadd.f32 %v456, %v528
    %v603 = vadd.f32 %v457, %v597
    %v604 = vadd.f32 %v458, %v599
    %v605 = vxor.u32 %v601, 2147483648
    %v606 = vmul.f32 %v605, 1.442695
    %v607 = vpow.pop %v606
    %v608 = vadd.f32 %v607, 1.0
    %v609 = vrcp.pop %v608
    %v610 = vmul.f32 1.0, %v609
    %v611 = vxor.u32 %v602, 2147483648
    %v612 = vmul.f32 %v611, 1.442695
    %v613 = vpow.pop %v612
    %v614 = vadd.f32 %v613, 1.0
    %v615 = vrcp.pop %v614
    %v616 = vmul.f32 1.0, %v615
    %v617 = vtanh.pop %v603
    %v618 = vxor.u32 %v604, 2147483648
    %v619 = vmul.f32 %v618, 1.442695
    %v620 = vpow.pop %v619
    %v621 = vadd.f32 %v620, 1.0
    %v622 = vrcp.pop %v621
    %v623 = vmul.f32 1.0, %v622
    %v624 = vmul.f32 %v616, %v454
    %v625 = vmul.f32 %v610, %v617
    %v626 = vadd.f32 %v624, %v625
    %v627 = vtanh.pop %v626
    %v628 = vmul.f32 %v623, %v627
    %s629 = scalar_lea.vmem [#allocation2], 32
    %v630 = vld [vmem:[%s629] sm:$0xff]
    %v631 = vld [vmem:[%s629 + $0x8] sm:$0xff]
    %v632 = vld [vmem:[%s629 + $0x10] sm:$0xff]
    %v633 = vld [vmem:[%s629 + $0x18] sm:$0xff]
    %634 = vmatprep.subr.mxu0 %v450
    %635 = vmatpush1.msra.mxu0 %v449
    %636 = vmatprep.subr.mxu0 %v446
    %637 = vmatpush1.msra.mxu0 %v445
    %638 = vmatprep.subr.mxu0 %v442
    %639 = vmatpush1.msra.mxu0 %v441
    %640 = vmatprep.subr.mxu0 %v438
    %641 = vmatpush1.msra.mxu0 %v437
    %642 = vmatprep.subr.mxu0 %v434
    %643 = vmatpush1.msra.mxu0 %v433
    %644 = vmatprep.subr.mxu0 %v430
    %645 = vmatpush1.msra.mxu0 %v429
    %646 = vmatprep.subr.mxu0 %v426
    %647 = vmatpush1.msra.mxu0 %v425
    %648 = vmatprep.subr.mxu0 %v422
    %649 = vmatpush1.msra.mxu0 %v421
    %650 = vmatprep.subr.mxu0 %v418
    %651 = vmatpush1.msra.mxu0 %v417
    %652 = vmatprep.subr.mxu0 %v414
    %653 = vmatpush1.msra.mxu0 %v413
    %654 = vmatprep.subr.mxu0 %v410
    %655 = vmatpush1.msra.mxu0 %v409
    %656 = vmatprep.subr.mxu0 %v406
    %657 = vmatpush1.msra.mxu0 %v405
    %658 = vmatprep.subr.mxu0 %v402
    %659 = vmatpush1.msra.mxu0 %v401
    %660 = vmatprep.subr.mxu0 %v398
    %661 = vmatpush1.msra.mxu0 %v397
    %662 = vmatprep.subr.mxu0 %v394
    %663 = vmatpush1.msra.mxu0 %v393
    %664 = vmatprep.subr.mxu0 %v390
    %665 = vmatpush1.msra.mxu0 %v389
    %666 = vmatprep.subr.mxu0 0.0
    %667 = vmatpush2.msra.mxu0 0.0
    %668 = vmatprep.subr.mxu0 0.0
    %669 = vmatpush2.msra.mxu0 0.0
    %670 = vmatprep.subr.mxu0 0.0
    %671 = vmatpush2.msra.mxu0 0.0
    %672 = vmatprep.subr.mxu0 0.0
    %673 = vmatpush2.msra.mxu0 0.0
    %674 = vmatprep.subr.mxu0 0.0
    %675 = vmatpush2.msra.mxu0 0.0
    %676 = vmatprep.subr.mxu0 0.0
    %677 = vmatpush2.msra.mxu0 0.0
    %678 = vmatprep.subr.mxu0 0.0
    %679 = vmatpush2.msra.mxu0 0.0
    %680 = vmatprep.subr.mxu0 0.0
    %681 = vmatpush2.msra.mxu0 0.0
    %682 = vmatprep.subr.mxu0 0.0
    %683 = vmatpush2.msra.mxu0 0.0
    %684 = vmatprep.subr.mxu0 0.0
    %685 = vmatpush2.msra.mxu0 0.0
    %686 = vmatprep.subr.mxu0 0.0
    %687 = vmatpush2.msra.mxu0 0.0
    %688 = vmatprep.subr.mxu0 0.0
    %689 = vmatpush2.msra.mxu0 0.0
    %690 = vmatprep.subr.mxu0 0.0
    %691 = vmatpush2.msra.mxu0 0.0
    %692 = vmatprep.subr.mxu0 0.0
    %693 = vmatpush2.msra.mxu0 0.0
    %694 = vmatprep.subr.mxu0 0.0
    %695 = vmatpush2.msra.mxu0 0.0
    %696 = vmatprep.subr.mxu0 0.0
    %697 = vmatpush2.msra.mxu0 0.0
    %698 = vmatprep.mubr.f32.mxu0 0.0
    %699 = vmatmul.mubr.f32.gmra.mxu0 %v628
    %v700 = vpop.f32.mrf.mxu0
    %v701 = vadd.f32 0.0, %v700
    %v702 = vpop.f32.mrf.mxu0
    %v703 = vadd.f32 0.0, %v702
    %704 = vdwg.mxu0
    %705 = vmatprep.subr.mxu0 %v452
    %706 = vmatpush1.msra.mxu0 %v451
    %707 = vmatprep.subr.mxu0 %v448
    %708 = vmatpush1.msra.mxu0 %v447
    %709 = vmatprep.subr.mxu0 %v444
    %710 = vmatpush1.msra.mxu0 %v443
    %711 = vmatprep.subr.mxu0 %v440
    %712 = vmatpush1.msra.mxu0 %v439
    %713 = vmatprep.subr.mxu0 %v436
    %714 = vmatpush1.msra.mxu0 %v435
    %715 = vmatprep.subr.mxu0 %v432
    %716 = vmatpush1.msra.mxu0 %v431
    %717 = vmatprep.subr.mxu0 %v428
    %718 = vmatpush1.msra.mxu0 %v427
    %719 = vmatprep.subr.mxu0 %v424
    %720 = vmatpush1.msra.mxu0 %v423
    %721 = vmatprep.subr.mxu0 %v420
    %722 = vmatpush1.msra.mxu0 %v419
    %723 = vmatprep.subr.mxu0 %v416
    %724 = vmatpush1.msra.mxu0 %v415
    %725 = vmatprep.subr.mxu0 %v412
    %726 = vmatpush1.msra.mxu0 %v411
    %727 = vmatprep.subr.mxu0 %v408
    %728 = vmatpush1.msra.mxu0 %v407
    %729 = vmatprep.subr.mxu0 %v404
    %730 = vmatpush1.msra.mxu0 %v403
    %731 = vmatprep.subr.mxu0 %v400
    %732 = vmatpush1.msra.mxu0 %v399
    %733 = vmatprep.subr.mxu0 %v396
    %734 = vmatpush1.msra.mxu0 %v395
    %735 = vmatprep.subr.mxu0 %v392
    %736 = vmatpush1.msra.mxu0 %v391
    %737 = vmatprep.subr.mxu0 0.0
    %738 = vmatpush2.msra.mxu0 0.0
    %739 = vmatprep.subr.mxu0 0.0
    %740 = vmatpush2.msra.mxu0 0.0
    %741 = vmatprep.subr.mxu0 0.0
    %742 = vmatpush2.msra.mxu0 0.0
    %743 = vmatprep.subr.mxu0 0.0
    %744 = vmatpush2.msra.mxu0 0.0
    %745 = vmatprep.subr.mxu0 0.0
    %746 = vmatpush2.msra.mxu0 0.0
    %747 = vmatprep.subr.mxu0 0.0
    %748 = vmatpush2.msra.mxu0 0.0
    %749 = vmatprep.subr.mxu0 0.0
    %750 = vmatpush2.msra.mxu0 0.0
    %751 = vmatprep.subr.mxu0 0.0
    %752 = vmatpush2.msra.mxu0 0.0
    %753 = vmatprep.subr.mxu0 0.0
    %754 = vmatpush2.msra.mxu0 0.0
    %755 = vmatprep.subr.mxu0 0.0
    %756 = vmatpush2.msra.mxu0 0.0
    %757 = vmatprep.subr.mxu0 0.0
    %758 = vmatpush2.msra.mxu0 0.0
    %759 = vmatprep.subr.mxu0 0.0
    %760 = vmatpush2.msra.mxu0 0.0
    %761 = vmatprep.subr.mxu0 0.0
    %762 = vmatpush2.msra.mxu0 0.0
    %763 = vmatprep.subr.mxu0 0.0
    %764 = vmatpush2.msra.mxu0 0.0
    %765 = vmatprep.subr.mxu0 0.0
    %766 = vmatpush2.msra.mxu0 0.0
    %767 = vmatprep.subr.mxu0 0.0
    %768 = vmatpush2.msra.mxu0 0.0
    %769 = vmatprep.mubr.f32.mxu0 0.0
    %770 = vmatmul.mubr.f32.gmra.mxu0 %v628
    %v771 = vpop.f32.mrf.mxu0
    %v772 = vadd.f32 0.0, %v771
    %v773 = vpop.f32.mrf.mxu0
    %v774 = vadd.f32 0.0, %v773
    %775 = vdwg.mxu0
    %v776 = vadd.f32 %v630, %v701
    %v777 = vadd.f32 %v631, %v703
    %v778 = vadd.f32 %v632, %v772
    %v779 = vadd.f32 %v633, %v774
    %v780 = vxor.u32 %v776, 2147483648
    %v781 = vmul.f32 %v780, 1.442695
    %v782 = vpow.pop %v781
    %v783 = vadd.f32 %v782, 1.0
    %v784 = vrcp.pop %v783
    %v785 = vmul.f32 1.0, %v784
    %v786 = vxor.u32 %v777, 2147483648
    %v787 = vmul.f32 %v786, 1.442695
    %v788 = vpow.pop %v787
    %v789 = vadd.f32 %v788, 1.0
    %v790 = vrcp.pop %v789
    %v791 = vmul.f32 1.0, %v790
    %v792 = vtanh.pop %v778
    %v793 = vxor.u32 %v779, 2147483648
    %v794 = vmul.f32 %v793, 1.442695
    %v795 = vpow.pop %v794
    %v796 = vadd.f32 %v795, 1.0
    %v797 = vrcp.pop %v796
    %v798 = vmul.f32 1.0, %v797
    %v799 = vmul.f32 %v791, %v626
    %v800 = vmul.f32 %v785, %v792
    %v801 = vadd.f32 %v799, %v800
    %v802 = vtanh.pop %v801
    %v803 = vmul.f32 %v798, %v802
    %s804 = scalar_lea.vmem [#allocation2], 64
    %v805 = vld [vmem:[%s804] sm:$0xff]
    %v806 = vld [vmem:[%s804 + $0x8] sm:$0xff]
    %v807 = vld [vmem:[%s804 + $0x10] sm:$0xff]
    %v808 = vld [vmem:[%s804 + $0x18] sm:$0xff]
    %809 = vmatprep.subr.mxu0 %v450
    %810 = vmatpush1.msra.mxu0 %v449
    %811 = vmatprep.subr.mxu0 %v446
    %812 = vmatpush1.msra.mxu0 %v445
    %813 = vmatprep.subr.mxu0 %v442
    %814 = vmatpush1.msra.mxu0 %v441
    %815 = vmatprep.subr.mxu0 %v438
    %816 = vmatpush1.msra.mxu0 %v437
    %817 = vmatprep.subr.mxu0 %v434
    %818 = vmatpush1.msra.mxu0 %v433
    %819 = vmatprep.subr.mxu0 %v430
    %820 = vmatpush1.msra.mxu0 %v429
    %821 = vmatprep.subr.mxu0 %v426
    %822 = vmatpush1.msra.mxu0 %v425
    %823 = vmatprep.subr.mxu0 %v422
    %824 = vmatpush1.msra.mxu0 %v421
    %825 = vmatprep.subr.mxu0 %v418
    %826 = vmatpush1.msra.mxu0 %v417
    %827 = vmatprep.subr.mxu0 %v414
    %828 = vmatpush1.msra.mxu0 %v413
    %829 = vmatprep.subr.mxu0 %v410
    %830 = vmatpush1.msra.mxu0 %v409
    %831 = vmatprep.subr.mxu0 %v406
    %832 = vmatpush1.msra.mxu0 %v405
    %833 = vmatprep.subr.mxu0 %v402
    %834 = vmatpush1.msra.mxu0 %v401
    %835 = vmatprep.subr.mxu0 %v398
    %836 = vmatpush1.msra.mxu0 %v397
    %837 = vmatprep.subr.mxu0 %v394
    %838 = vmatpush1.msra.mxu0 %v393
    %839 = vmatprep.subr.mxu0 %v390
    %840 = vmatpush1.msra.mxu0 %v389
    %841 = vmatprep.subr.mxu0 0.0
    %842 = vmatpush2.msra.mxu0 0.0
    %843 = vmatprep.subr.mxu0 0.0
    %844 = vmatpush2.msra.mxu0 0.0
    %845 = vmatprep.subr.mxu0 0.0
    %846 = vmatpush2.msra.mxu0 0.0
    %847 = vmatprep.subr.mxu0 0.0
    %848 = vmatpush2.msra.mxu0 0.0
    %849 = vmatprep.subr.mxu0 0.0
    %850 = vmatpush2.msra.mxu0 0.0
    %851 = vmatprep.subr.mxu0 0.0
    %852 = vmatpush2.msra.mxu0 0.0
    %853 = vmatprep.subr.mxu0 0.0
    %854 = vmatpush2.msra.mxu0 0.0
    %855 = vmatprep.subr.mxu0 0.0
    %856 = vmatpush2.msra.mxu0 0.0
    %857 = vmatprep.subr.mxu0 0.0
    %858 = vmatpush2.msra.mxu0 0.0
    %859 = vmatprep.subr.mxu0 0.0
    %860 = vmatpush2.msra.mxu0 0.0
    %861 = vmatprep.subr.mxu0 0.0
    %862 = vmatpush2.msra.mxu0 0.0
    %863 = vmatprep.subr.mxu0 0.0
    %864 = vmatpush2.msra.mxu0 0.0
    %865 = vmatprep.subr.mxu0 0.0
    %866 = vmatpush2.msra.mxu0 0.0
    %867 = vmatprep.subr.mxu0 0.0
    %868 = vmatpush2.msra.mxu0 0.0
    %869 = vmatprep.subr.mxu0 0.0
    %870 = vmatpush2.msra.mxu0 0.0
    %871 = vmatprep.subr.mxu0 0.0
    %872 = vmatpush2.msra.mxu0 0.0
    %873 = vmatprep.mubr.f32.mxu0 0.0
    %874 = vmatmul.mubr.f32.gmra.mxu0 %v803
    %v875 = vpop.f32.mrf.mxu0
    %v876 = vadd.f32 0.0, %v875
    %v877 = vpop.f32.mrf.mxu0
    %v878 = vadd.f32 0.0, %v877
    %879 = vdwg.mxu0
    %880 = vmatprep.subr.mxu0 %v452
    %881 = vmatpush1.msra.mxu0 %v451
    %882 = vmatprep.subr.mxu0 %v448
    %883 = vmatpush1.msra.mxu0 %v447
    %884 = vmatprep.subr.mxu0 %v444
    %885 = vmatpush1.msra.mxu0 %v443
    %886 = vmatprep.subr.mxu0 %v440
    %887 = vmatpush1.msra.mxu0 %v439
    %888 = vmatprep.subr.mxu0 %v436
    %889 = vmatpush1.msra.mxu0 %v435
    %890 = vmatprep.subr.mxu0 %v432
    %891 = vmatpush1.msra.mxu0 %v431
    %892 = vmatprep.subr.mxu0 %v428
    %893 = vmatpush1.msra.mxu0 %v427
    %894 = vmatprep.subr.mxu0 %v424
    %895 = vmatpush1.msra.mxu0 %v423
    %896 = vmatprep.subr.mxu0 %v420
    %897 = vmatpush1.msra.mxu0 %v419
    %898 = vmatprep.subr.mxu0 %v416
    %899 = vmatpush1.msra.mxu0 %v415
    %900 = vmatprep.subr.mxu0 %v412
    %901 = vmatpush1.msra.mxu0 %v411
    %902 = vmatprep.subr.mxu0 %v408
    %903 = vmatpush1.msra.mxu0 %v407
    %904 = vmatprep.subr.mxu0 %v404
    %905 = vmatpush1.msra.mxu0 %v403
    %906 = vmatprep.subr.mxu0 %v400
    %907 = vmatpush1.msra.mxu0 %v399
    %908 = vmatprep.subr.mxu0 %v396
    %909 = vmatpush1.msra.mxu0 %v395
    %910 = vmatprep.subr.mxu0 %v392
    %911 = vmatpush1.msra.mxu0 %v391
    %912 = vmatprep.subr.mxu0 0.0
    %913 = vmatpush2.msra.mxu0 0.0
    %914 = vmatprep.subr.mxu0 0.0
    %915 = vmatpush2.msra.mxu0 0.0
    %916 = vmatprep.subr.mxu0 0.0
    %917 = vmatpush2.msra.mxu0 0.0
    %918 = vmatprep.subr.mxu0 0.0
    %919 = vmatpush2.msra.mxu0 0.0
    %920 = vmatprep.subr.mxu0 0.0
    %921 = vmatpush2.msra.mxu0 0.0
    %922 = vmatprep.subr.mxu0 0.0
    %923 = vmatpush2.msra.mxu0 0.0
    %924 = vmatprep.subr.mxu0 0.0
    %925 = vmatpush2.msra.mxu0 0.0
    %926 = vmatprep.subr.mxu0 0.0
    %927 = vmatpush2.msra.mxu0 0.0
    %928 = vmatprep.subr.mxu0 0.0
    %929 = vmatpush2.msra.mxu0 0.0
    %930 = vmatprep.subr.mxu0 0.0
    %931 = vmatpush2.msra.mxu0 0.0
    %932 = vmatprep.subr.mxu0 0.0
    %933 = vmatpush2.msra.mxu0 0.0
    %934 = vmatprep.subr.mxu0 0.0
    %935 = vmatpush2.msra.mxu0 0.0
    %936 = vmatprep.subr.mxu0 0.0
    %937 = vmatpush2.msra.mxu0 0.0
    %938 = vmatprep.subr.mxu0 0.0
    %939 = vmatpush2.msra.mxu0 0.0
    %940 = vmatprep.subr.mxu0 0.0
    %941 = vmatpush2.msra.mxu0 0.0
    %942 = vmatprep.subr.mxu0 0.0
    %943 = vmatpush2.msra.mxu0 0.0
    %944 = vmatprep.mubr.f32.mxu0 0.0
    %945 = vmatmul.mubr.f32.gmra.mxu0 %v803
    %v946 = vpop.f32.mrf.mxu0
    %v947 = vadd.f32 0.0, %v946
    %v948 = vpop.f32.mrf.mxu0
    %v949 = vadd.f32 0.0, %v948
    %950 = vdwg.mxu0
    %v951 = vadd.f32 %v805, %v876
    %v952 = vadd.f32 %v806, %v878
    %v953 = vadd.f32 %v807, %v947
    %v954 = vadd.f32 %v808, %v949
    %v955 = vxor.u32 %v951, 2147483648
    %v956 = vmul.f32 %v955, 1.442695
    %v957 = vpow.pop %v956
    %v958 = vadd.f32 %v957, 1.0
    %v959 = vrcp.pop %v958
    %v960 = vmul.f32 1.0, %v959
    %v961 = vxor.u32 %v952, 2147483648
    %v962 = vmul.f32 %v961, 1.442695
    %v963 = vpow.pop %v962
    %v964 = vadd.f32 %v963, 1.0
    %v965 = vrcp.pop %v964
    %v966 = vmul.f32 1.0, %v965
    %v967 = vtanh.pop %v953
    %v968 = vxor.u32 %v954, 2147483648
    %v969 = vmul.f32 %v968, 1.442695
    %v970 = vpow.pop %v969
    %v971 = vadd.f32 %v970, 1.0
    %v972 = vrcp.pop %v971
    %v973 = vmul.f32 1.0, %v972
    %v974 = vmul.f32 %v966, %v801
    %v975 = vmul.f32 %v960, %v967
    %v976 = vadd.f32 %v974, %v975
    %v977 = vtanh.pop %v976
    %v978 = vmul.f32 %v973, %v977
    %s979 = scalar_lea.vmem [#allocation2], 96
    %v980 = vld [vmem:[%s979] sm:$0xff]
    %v981 = vld [vmem:[%s979 + $0x8] sm:$0xff]
    %v982 = vld [vmem:[%s979 + $0x10] sm:$0xff]
    %v983 = vld [vmem:[%s979 + $0x18] sm:$0xff]
    %984 = vmatprep.subr.mxu0 %v450
    %985 = vmatpush1.msra.mxu0 %v449
    %986 = vmatprep.subr.mxu0 %v446
    %987 = vmatpush1.msra.mxu0 %v445
    %988 = vmatprep.subr.mxu0 %v442
    %989 = vmatpush1.msra.mxu0 %v441
    %990 = vmatprep.subr.mxu0 %v438
    %991 = vmatpush1.msra.mxu0 %v437
    %992 = vmatprep.subr.mxu0 %v434
    %993 = vmatpush1.msra.mxu0 %v433
    %994 = vmatprep.subr.mxu0 %v430
    %995 = vmatpush1.msra.mxu0 %v429
    %996 = vmatprep.subr.mxu0 %v426
    %997 = vmatpush1.msra.mxu0 %v425
    %998 = vmatprep.subr.mxu0 %v422
    %999 = vmatpush1.msra.mxu0 %v421
    %1000 = vmatprep.subr.mxu0 %v418
    %1001 = vmatpush1.msra.mxu0 %v417
    %1002 = vmatprep.subr.mxu0 %v414
    %1003 = vmatpush1.msra.mxu0 %v413
    %1004 = vmatprep.subr.mxu0 %v410
    %1005 = vmatpush1.msra.mxu0 %v409
    %1006 = vmatprep.subr.mxu0 %v406
    %1007 = vmatpush1.msra.mxu0 %v405
    %1008 = vmatprep.subr.mxu0 %v402
    %1009 = vmatpush1.msra.mxu0 %v401
    %1010 = vmatprep.subr.mxu0 %v398
    %1011 = vmatpush1.msra.mxu0 %v397
    %1012 = vmatprep.subr.mxu0 %v394
    %1013 = vmatpush1.msra.mxu0 %v393
    %1014 = vmatprep.subr.mxu0 %v390
    %1015 = vmatpush1.msra.mxu0 %v389
    %1016 = vmatprep.subr.mxu0 0.0
    %1017 = vmatpush2.msra.mxu0 0.0
    %1018 = vmatprep.subr.mxu0 0.0
    %1019 = vmatpush2.msra.mxu0 0.0
    %1020 = vmatprep.subr.mxu0 0.0
    %1021 = vmatpush2.msra.mxu0 0.0
    %1022 = vmatprep.subr.mxu0 0.0
    %1023 = vmatpush2.msra.mxu0 0.0
    %1024 = vmatprep.subr.mxu0 0.0
    %1025 = vmatpush2.msra.mxu0 0.0
    %1026 = vmatprep.subr.mxu0 0.0
    %1027 = vmatpush2.msra.mxu0 0.0
    %1028 = vmatprep.subr.mxu0 0.0
    %1029 = vmatpush2.msra.mxu0 0.0
    %1030 = vmatprep.subr.mxu0 0.0
    %1031 = vmatpush2.msra.mxu0 0.0
    %1032 = vmatprep.subr.mxu0 0.0
    %1033 = vmatpush2.msra.mxu0 0.0
    %1034 = vmatprep.subr.mxu0 0.0
    %1035 = vmatpush2.msra.mxu0 0.0
    %1036 = vmatprep.subr.mxu0 0.0
    %1037 = vmatpush2.msra.mxu0 0.0
    %1038 = vmatprep.subr.mxu0 0.0
    %1039 = vmatpush2.msra.mxu0 0.0
    %1040 = vmatprep.subr.mxu0 0.0
    %1041 = vmatpush2.msra.mxu0 0.0
    %1042 = vmatprep.subr.mxu0 0.0
    %1043 = vmatpush2.msra.mxu0 0.0
    %1044 = vmatprep.subr.mxu0 0.0
    %1045 = vmatpush2.msra.mxu0 0.0
    %1046 = vmatprep.subr.mxu0 0.0
    %1047 = vmatpush2.msra.mxu0 0.0
    %1048 = vmatprep.mubr.f32.mxu0 0.0
    %1049 = vmatmul.mubr.f32.gmra.mxu0 %v978
    %v1050 = vpop.f32.mrf.mxu0
    %v1051 = vadd.f32 0.0, %v1050
    %v1052 = vpop.f32.mrf.mxu0
    %v1053 = vadd.f32 0.0, %v1052
    %1054 = vdwg.mxu0
    %1055 = vmatprep.subr.mxu0 %v452
    %1056 = vmatpush1.msra.mxu0 %v451
    %1057 = vmatprep.subr.mxu0 %v448
    %1058 = vmatpush1.msra.mxu0 %v447
    %1059 = vmatprep.subr.mxu0 %v444
    %1060 = vmatpush1.msra.mxu0 %v443
    %1061 = vmatprep.subr.mxu0 %v440
    %1062 = vmatpush1.msra.mxu0 %v439
    %1063 = vmatprep.subr.mxu0 %v436
    %1064 = vmatpush1.msra.mxu0 %v435
    %1065 = vmatprep.subr.mxu0 %v432
    %1066 = vmatpush1.msra.mxu0 %v431
    %1067 = vmatprep.subr.mxu0 %v428
    %1068 = vmatpush1.msra.mxu0 %v427
    %1069 = vmatprep.subr.mxu0 %v424
    %1070 = vmatpush1.msra.mxu0 %v423
    %1071 = vmatprep.subr.mxu0 %v420
    %1072 = vmatpush1.msra.mxu0 %v419
    %1073 = vmatprep.subr.mxu0 %v416
    %1074 = vmatpush1.msra.mxu0 %v415
    %1075 = vmatprep.subr.mxu0 %v412
    %1076 = vmatpush1.msra.mxu0 %v411
    %1077 = vmatprep.subr.mxu0 %v408
    %1078 = vmatpush1.msra.mxu0 %v407
    %1079 = vmatprep.subr.mxu0 %v404
    %1080 = vmatpush1.msra.mxu0 %v403
    %1081 = vmatprep.subr.mxu0 %v400
    %1082 = vmatpush1.msra.mxu0 %v399
    %1083 = vmatprep.subr.mxu0 %v396
    %1084 = vmatpush1.msra.mxu0 %v395
    %1085 = vmatprep.subr.mxu0 %v392
    %1086 = vmatpush1.msra.mxu0 %v391
    %1087 = vmatprep.subr.mxu0 0.0
    %1088 = vmatpush2.msra.mxu0 0.0
    %1089 = vmatprep.subr.mxu0 0.0
    %1090 = vmatpush2.msra.mxu0 0.0
    %1091 = vmatprep.subr.mxu0 0.0
    %1092 = vmatpush2.msra.mxu0 0.0
    %1093 = vmatprep.subr.mxu0 0.0
    %1094 = vmatpush2.msra.mxu0 0.0
    %1095 = vmatprep.subr.mxu0 0.0
    %1096 = vmatpush2.msra.mxu0 0.0
    %1097 = vmatprep.subr.mxu0 0.0
    %1098 = vmatpush2.msra.mxu0 0.0
    %1099 = vmatprep.subr.mxu0 0.0
    %1100 = vmatpush2.msra.mxu0 0.0
    %1101 = vmatprep.subr.mxu0 0.0
    %1102 = vmatpush2.msra.mxu0 0.0
    %1103 = vmatprep.subr.mxu0 0.0
    %1104 = vmatpush2.msra.mxu0 0.0
    %1105 = vmatprep.subr.mxu0 0.0
    %1106 = vmatpush2.msra.mxu0 0.0
    %1107 = vmatprep.subr.mxu0 0.0
    %1108 = vmatpush2.msra.mxu0 0.0
    %1109 = vmatprep.subr.mxu0 0.0
    %1110 = vmatpush2.msra.mxu0 0.0
    %1111 = vmatprep.subr.mxu0 0.0
    %1112 = vmatpush2.msra.mxu0 0.0
    %1113 = vmatprep.subr.mxu0 0.0
    %1114 = vmatpush2.msra.mxu0 0.0
    %1115 = vmatprep.subr.mxu0 0.0
    %1116 = vmatpush2.msra.mxu0 0.0
    %1117 = vmatprep.subr.mxu0 0.0
    %1118 = vmatpush2.msra.mxu0 0.0
    %1119 = vmatprep.mubr.f32.mxu0 0.0
    %1120 = vmatmul.mubr.f32.gmra.mxu0 %v978
    %v1121 = vpop.f32.mrf.mxu0
    %v1122 = vadd.f32 0.0, %v1121
    %v1123 = vpop.f32.mrf.mxu0
    %v1124 = vadd.f32 0.0, %v1123
    %1125 = vdwg.mxu0
    %v1126 = vadd.f32 %v980, %v1051
    %v1127 = vadd.f32 %v981, %v1053
    %v1128 = vadd.f32 %v982, %v1122
    %v1129 = vadd.f32 %v983, %v1124
    %v1130 = vxor.u32 %v1126, 2147483648
    %v1131 = vmul.f32 %v1130, 1.442695
    %v1132 = vpow.pop %v1131
    %v1133 = vadd.f32 %v1132, 1.0
    %v1134 = vrcp.pop %v1133
    %v1135 = vmul.f32 1.0, %v1134
    %v1136 = vxor.u32 %v1127, 2147483648
    %v1137 = vmul.f32 %v1136, 1.442695
    %v1138 = vpow.pop %v1137
    %v1139 = vadd.f32 %v1138, 1.0
    %v1140 = vrcp.pop %v1139
    %v1141 = vmul.f32 1.0, %v1140
    %v1142 = vtanh.pop %v1128
    %v1143 = vxor.u32 %v1129, 2147483648
    %v1144 = vmul.f32 %v1143, 1.442695
    %v1145 = vpow.pop %v1144
    %v1146 = vadd.f32 %v1145, 1.0
    %v1147 = vrcp.pop %v1146
    %v1148 = vmul.f32 1.0, %v1147
    %v1149 = vmul.f32 %v1141, %v976
    %v1150 = vmul.f32 %v1135, %v1142
    %v1151 = vadd.f32 %v1149, %v1150
    %v1152 = vtanh.pop %v1151
    %v1153 = vmul.f32 %v1148, %v1152
    %s1154 = scalar_lea.vmem [#allocation2], 128
    %v1155 = vld [vmem:[%s1154] sm:$0xff]
    %v1156 = vld [vmem:[%s1154 + $0x8] sm:$0xff]
    %v1157 = vld [vmem:[%s1154 + $0x10] sm:$0xff]
    %v1158 = vld [vmem:[%s1154 + $0x18] sm:$0xff]
    %1159 = vmatprep.subr.mxu0 %v450
    %1160 = vmatpush1.msra.mxu0 %v449
    %1161 = vmatprep.subr.mxu0 %v446
    %1162 = vmatpush1.msra.mxu0 %v445
    %1163 = vmatprep.subr.mxu0 %v442
    %1164 = vmatpush1.msra.mxu0 %v441
    %1165 = vmatprep.subr.mxu0 %v438
    %1166 = vmatpush1.msra.mxu0 %v437
    %1167 = vmatprep.subr.mxu0 %v434
    %1168 = vmatpush1.msra.mxu0 %v433
    %1169 = vmatprep.subr.mxu0 %v430
    %1170 = vmatpush1.msra.mxu0 %v429
    %1171 = vmatprep.subr.mxu0 %v426
    %1172 = vmatpush1.msra.mxu0 %v425
    %1173 = vmatprep.subr.mxu0 %v422
    %1174 = vmatpush1.msra.mxu0 %v421
    %1175 = vmatprep.subr.mxu0 %v418
    %1176 = vmatpush1.msra.mxu0 %v417
    %1177 = vmatprep.subr.mxu0 %v414
    %1178 = vmatpush1.msra.mxu0 %v413
    %1179 = vmatprep.subr.mxu0 %v410
    %1180 = vmatpush1.msra.mxu0 %v409
    %1181 = vmatprep.subr.mxu0 %v406
    %1182 = vmatpush1.msra.mxu0 %v405
    %1183 = vmatprep.subr.mxu0 %v402
    %1184 = vmatpush1.msra.mxu0 %v401
    %1185 = vmatprep.subr.mxu0 %v398
    %1186 = vmatpush1.msra.mxu0 %v397
    %1187 = vmatprep.subr.mxu0 %v394
    %1188 = vmatpush1.msra.mxu0 %v393
    %1189 = vmatprep.subr.mxu0 %v390
    %1190 = vmatpush1.msra.mxu0 %v389
    %1191 = vmatprep.subr.mxu0 0.0
    %1192 = vmatpush2.msra.mxu0 0.0
    %1193 = vmatprep.subr.mxu0 0.0
    %1194 = vmatpush2.msra.mxu0 0.0
    %1195 = vmatprep.subr.mxu0 0.0
    %1196 = vmatpush2.msra.mxu0 0.0
    %1197 = vmatprep.subr.mxu0 0.0
    %1198 = vmatpush2.msra.mxu0 0.0
    %1199 = vmatprep.subr.mxu0 0.0
    %1200 = vmatpush2.msra.mxu0 0.0
    %1201 = vmatprep.subr.mxu0 0.0
    %1202 = vmatpush2.msra.mxu0 0.0
    %1203 = vmatprep.subr.mxu0 0.0
    %1204 = vmatpush2.msra.mxu0 0.0
    %1205 = vmatprep.subr.mxu0 0.0
    %1206 = vmatpush2.msra.mxu0 0.0
    %1207 = vmatprep.subr.mxu0 0.0
    %1208 = vmatpush2.msra.mxu0 0.0
    %1209 = vmatprep.subr.mxu0 0.0
    %1210 = vmatpush2.msra.mxu0 0.0
    %1211 = vmatprep.subr.mxu0 0.0
    %1212 = vmatpush2.msra.mxu0 0.0
    %1213 = vmatprep.subr.mxu0 0.0
    %1214 = vmatpush2.msra.mxu0 0.0
    %1215 = vmatprep.subr.mxu0 0.0
    %1216 = vmatpush2.msra.mxu0 0.0
    %1217 = vmatprep.subr.mxu0 0.0
    %1218 = vmatpush2.msra.mxu0 0.0
    %1219 = vmatprep.subr.mxu0 0.0
    %1220 = vmatpush2.msra.mxu0 0.0
    %1221 = vmatprep.subr.mxu0 0.0
    %1222 = vmatpush2.msra.mxu0 0.0
    %1223 = vmatprep.mubr.f32.mxu0 0.0
    %1224 = vmatmul.mubr.f32.gmra.mxu0 %v1153
    %v1225 = vpop.f32.mrf.mxu0
    %v1226 = vadd.f32 0.0, %v1225
    %v1227 = vpop.f32.mrf.mxu0
    %v1228 = vadd.f32 0.0, %v1227
    %1229 = vdwg.mxu0
    %1230 = vmatprep.subr.mxu0 %v452
    %1231 = vmatpush1.msra.mxu0 %v451
    %1232 = vmatprep.subr.mxu0 %v448
    %1233 = vmatpush1.msra.mxu0 %v447
    %1234 = vmatprep.subr.mxu0 %v444
    %1235 = vmatpush1.msra.mxu0 %v443
    %1236 = vmatprep.subr.mxu0 %v440
    %1237 = vmatpush1.msra.mxu0 %v439
    %1238 = vmatprep.subr.mxu0 %v436
    %1239 = vmatpush1.msra.mxu0 %v435
    %1240 = vmatprep.subr.mxu0 %v432
    %1241 = vmatpush1.msra.mxu0 %v431
    %1242 = vmatprep.subr.mxu0 %v428
    %1243 = vmatpush1.msra.mxu0 %v427
    %1244 = vmatprep.subr.mxu0 %v424
    %1245 = vmatpush1.msra.mxu0 %v423
    %1246 = vmatprep.subr.mxu0 %v420
    %1247 = vmatpush1.msra.mxu0 %v419
    %1248 = vmatprep.subr.mxu0 %v416
    %1249 = vmatpush1.msra.mxu0 %v415
    %1250 = vmatprep.subr.mxu0 %v412
    %1251 = vmatpush1.msra.mxu0 %v411
    %1252 = vmatprep.subr.mxu0 %v408
    %1253 = vmatpush1.msra.mxu0 %v407
    %1254 = vmatprep.subr.mxu0 %v404
    %1255 = vmatpush1.msra.mxu0 %v403
    %1256 = vmatprep.subr.mxu0 %v400
    %1257 = vmatpush1.msra.mxu0 %v399
    %1258 = vmatprep.subr.mxu0 %v396
    %1259 = vmatpush1.msra.mxu0 %v395
    %1260 = vmatprep.subr.mxu0 %v392
    %1261 = vmatpush1.msra.mxu0 %v391
    %1262 = vmatprep.subr.mxu0 0.0
    %1263 = vmatpush2.msra.mxu0 0.0
    %1264 = vmatprep.subr.mxu0 0.0
    %1265 = vmatpush2.msra.mxu0 0.0
    %1266 = vmatprep.subr.mxu0 0.0
    %1267 = vmatpush2.msra.mxu0 0.0
    %1268 = vmatprep.subr.mxu0 0.0
    %1269 = vmatpush2.msra.mxu0 0.0
    %1270 = vmatprep.subr.mxu0 0.0
    %1271 = vmatpush2.msra.mxu0 0.0
    %1272 = vmatprep.subr.mxu0 0.0
    %1273 = vmatpush2.msra.mxu0 0.0
    %1274 = vmatprep.subr.mxu0 0.0
    %1275 = vmatpush2.msra.mxu0 0.0
    %1276 = vmatprep.subr.mxu0 0.0
    %1277 = vmatpush2.msra.mxu0 0.0
    %1278 = vmatprep.subr.mxu0 0.0
    %1279 = vmatpush2.msra.mxu0 0.0
    %1280 = vmatprep.subr.mxu0 0.0
    %1281 = vmatpush2.msra.mxu0 0.0
    %1282 = vmatprep.subr.mxu0 0.0
    %1283 = vmatpush2.msra.mxu0 0.0
    %1284 = vmatprep.subr.mxu0 0.0
    %1285 = vmatpush2.msra.mxu0 0.0
    %1286 = vmatprep.subr.mxu0 0.0
    %1287 = vmatpush2.msra.mxu0 0.0
    %1288 = vmatprep.subr.mxu0 0.0
    %1289 = vmatpush2.msra.mxu0 0.0
    %1290 = vmatprep.subr.mxu0 0.0
    %1291 = vmatpush2.msra.mxu0 0.0
    %1292 = vmatprep.subr.mxu0 0.0
    %1293 = vmatpush2.msra.mxu0 0.0
    %1294 = vmatprep.mubr.f32.mxu0 0.0
    %1295 = vmatmul.mubr.f32.gmra.mxu0 %v1153
    %v1296 = vpop.f32.mrf.mxu0
    %v1297 = vadd.f32 0.0, %v1296
    %v1298 = vpop.f32.mrf.mxu0
    %v1299 = vadd.f32 0.0, %v1298
    %1300 = vdwg.mxu0
    %v1301 = vadd.f32 %v1155, %v1226
    %v1302 = vadd.f32 %v1156, %v1228
    %v1303 = vadd.f32 %v1157, %v1297
    %v1304 = vadd.f32 %v1158, %v1299
    %v1305 = vxor.u32 %v1301, 2147483648
    %v1306 = vmul.f32 %v1305, 1.442695
    %v1307 = vpow.pop %v1306
    %v1308 = vadd.f32 %v1307, 1.0
    %v1309 = vrcp.pop %v1308
    %v1310 = vmul.f32 1.0, %v1309
    %v1311 = vxor.u32 %v1302, 2147483648
    %v1312 = vmul.f32 %v1311, 1.442695
    %v1313 = vpow.pop %v1312
    %v1314 = vadd.f32 %v1313, 1.0
    %v1315 = vrcp.pop %v1314
    %v1316 = vmul.f32 1.0, %v1315
    %v1317 = vtanh.pop %v1303
    %v1318 = vxor.u32 %v1304, 2147483648
    %v1319 = vmul.f32 %v1318, 1.442695
    %v1320 = vpow.pop %v1319
    %v1321 = vadd.f32 %v1320, 1.0
    %v1322 = vrcp.pop %v1321
    %v1323 = vmul.f32 1.0, %v1322
    %v1324 = vmul.f32 %v1316, %v1151
    %v1325 = vmul.f32 %v1310, %v1317
    %v1326 = vadd.f32 %v1324, %v1325
    %v1327 = vtanh.pop %v1326
    %v1328 = vmul.f32 %v1323, %v1327
    %s1329 = scalar_lea.vmem [#allocation2], 160
    %v1330 = vld [vmem:[%s1329] sm:$0xff]
    %v1331 = vld [vmem:[%s1329 + $0x8] sm:$0xff]
    %v1332 = vld [vmem:[%s1329 + $0x10] sm:$0xff]
    %v1333 = vld [vmem:[%s1329 + $0x18] sm:$0xff]
    %1334 = vmatprep.subr.mxu0 %v450
    %1335 = vmatpush1.msra.mxu0 %v449
    %1336 = vmatprep.subr.mxu0 %v446
    %1337 = vmatpush1.msra.mxu0 %v445
    %1338 = vmatprep.subr.mxu0 %v442
    %1339 = vmatpush1.msra.mxu0 %v441
    %1340 = vmatprep.subr.mxu0 %v438
    %1341 = vmatpush1.msra.mxu0 %v437
    %1342 = vmatprep.subr.mxu0 %v434
    %1343 = vmatpush1.msra.mxu0 %v433
    %1344 = vmatprep.subr.mxu0 %v430
    %1345 = vmatpush1.msra.mxu0 %v429
    %1346 = vmatprep.subr.mxu0 %v426
    %1347 = vmatpush1.msra.mxu0 %v425
    %1348 = vmatprep.subr.mxu0 %v422
    %1349 = vmatpush1.msra.mxu0 %v421
    %1350 = vmatprep.subr.mxu0 %v418
    %1351 = vmatpush1.msra.mxu0 %v417
    %1352 = vmatprep.subr.mxu0 %v414
    %1353 = vmatpush1.msra.mxu0 %v413
    %1354 = vmatprep.subr.mxu0 %v410
    %1355 = vmatpush1.msra.mxu0 %v409
    %1356 = vmatprep.subr.mxu0 %v406
    %1357 = vmatpush1.msra.mxu0 %v405
    %1358 = vmatprep.subr.mxu0 %v402
    %1359 = vmatpush1.msra.mxu0 %v401
    %1360 = vmatprep.subr.mxu0 %v398
    %1361 = vmatpush1.msra.mxu0 %v397
    %1362 = vmatprep.subr.mxu0 %v394
    %1363 = vmatpush1.msra.mxu0 %v393
    %1364 = vmatprep.subr.mxu0 %v390
    %1365 = vmatpush1.msra.mxu0 %v389
    %1366 = vmatprep.subr.mxu0 0.0
    %1367 = vmatpush2.msra.mxu0 0.0
    %1368 = vmatprep.subr.mxu0 0.0
    %1369 = vmatpush2.msra.mxu0 0.0
    %1370 = vmatprep.subr.mxu0 0.0
    %1371 = vmatpush2.msra.mxu0 0.0
    %1372 = vmatprep.subr.mxu0 0.0
    %1373 = vmatpush2.msra.mxu0 0.0
    %1374 = vmatprep.subr.mxu0 0.0
    %1375 = vmatpush2.msra.mxu0 0.0
    %1376 = vmatprep.subr.mxu0 0.0
    %1377 = vmatpush2.msra.mxu0 0.0
    %1378 = vmatprep.subr.mxu0 0.0
    %1379 = vmatpush2.msra.mxu0 0.0
    %1380 = vmatprep.subr.mxu0 0.0
    %1381 = vmatpush2.msra.mxu0 0.0
    %1382 = vmatprep.subr.mxu0 0.0
    %1383 = vmatpush2.msra.mxu0 0.0
    %1384 = vmatprep.subr.mxu0 0.0
    %1385 = vmatpush2.msra.mxu0 0.0
    %1386 = vmatprep.subr.mxu0 0.0
    %1387 = vmatpush2.msra.mxu0 0.0
    %1388 = vmatprep.subr.mxu0 0.0
    %1389 = vmatpush2.msra.mxu0 0.0
    %1390 = vmatprep.subr.mxu0 0.0
    %1391 = vmatpush2.msra.mxu0 0.0
    %1392 = vmatprep.subr.mxu0 0.0
    %1393 = vmatpush2.msra.mxu0 0.0
    %1394 = vmatprep.subr.mxu0 0.0
    %1395 = vmatpush2.msra.mxu0 0.0
    %1396 = vmatprep.subr.mxu0 0.0
    %1397 = vmatpush2.msra.mxu0 0.0
    %1398 = vmatprep.mubr.f32.mxu0 0.0
    %1399 = vmatmul.mubr.f32.gmra.mxu0 %v1328
    %v1400 = vpop.f32.mrf.mxu0
    %v1401 = vadd.f32 0.0, %v1400
    %v1402 = vpop.f32.mrf.mxu0
    %v1403 = vadd.f32 0.0, %v1402
    %1404 = vdwg.mxu0
    %1405 = vmatprep.subr.mxu0 %v452
    %1406 = vmatpush1.msra.mxu0 %v451
    %1407 = vmatprep.subr.mxu0 %v448
    %1408 = vmatpush1.msra.mxu0 %v447
    %1409 = vmatprep.subr.mxu0 %v444
    %1410 = vmatpush1.msra.mxu0 %v443
    %1411 = vmatprep.subr.mxu0 %v440
    %1412 = vmatpush1.msra.mxu0 %v439
    %1413 = vmatprep.subr.mxu0 %v436
    %1414 = vmatpush1.msra.mxu0 %v435
    %1415 = vmatprep.subr.mxu0 %v432
    %1416 = vmatpush1.msra.mxu0 %v431
    %1417 = vmatprep.subr.mxu0 %v428
    %1418 = vmatpush1.msra.mxu0 %v427
    %1419 = vmatprep.subr.mxu0 %v424
    %1420 = vmatpush1.msra.mxu0 %v423
    %1421 = vmatprep.subr.mxu0 %v420
    %1422 = vmatpush1.msra.mxu0 %v419
    %1423 = vmatprep.subr.mxu0 %v416
    %1424 = vmatpush1.msra.mxu0 %v415
    %1425 = vmatprep.subr.mxu0 %v412
    %1426 = vmatpush1.msra.mxu0 %v411
    %1427 = vmatprep.subr.mxu0 %v408
    %1428 = vmatpush1.msra.mxu0 %v407
    %1429 = vmatprep.subr.mxu0 %v404
    %1430 = vmatpush1.msra.mxu0 %v403
    %1431 = vmatprep.subr.mxu0 %v400
    %1432 = vmatpush1.msra.mxu0 %v399
    %1433 = vmatprep.subr.mxu0 %v396
    %1434 = vmatpush1.msra.mxu0 %v395
    %1435 = vmatprep.subr.mxu0 %v392
    %1436 = vmatpush1.msra.mxu0 %v391
    %1437 = vmatprep.subr.mxu0 0.0
    %1438 = vmatpush2.msra.mxu0 0.0
    %1439 = vmatprep.subr.mxu0 0.0
    %1440 = vmatpush2.msra.mxu0 0.0
    %1441 = vmatprep.subr.mxu0 0.0
    %1442 = vmatpush2.msra.mxu0 0.0
    %1443 = vmatprep.subr.mxu0 0.0
    %1444 = vmatpush2.msra.mxu0 0.0
    %1445 = vmatprep.subr.mxu0 0.0
    %1446 = vmatpush2.msra.mxu0 0.0
    %1447 = vmatprep.subr.mxu0 0.0
    %1448 = vmatpush2.msra.mxu0 0.0
    %1449 = vmatprep.subr.mxu0 0.0
    %1450 = vmatpush2.msra.mxu0 0.0
    %1451 = vmatprep.subr.mxu0 0.0
    %1452 = vmatpush2.msra.mxu0 0.0
    %1453 = vmatprep.subr.mxu0 0.0
    %1454 = vmatpush2.msra.mxu0 0.0
    %1455 = vmatprep.subr.mxu0 0.0
    %1456 = vmatpush2.msra.mxu0 0.0
    %1457 = vmatprep.subr.mxu0 0.0
    %1458 = vmatpush2.msra.mxu0 0.0
    %1459 = vmatprep.subr.mxu0 0.0
    %1460 = vmatpush2.msra.mxu0 0.0
    %1461 = vmatprep.subr.mxu0 0.0
    %1462 = vmatpush2.msra.mxu0 0.0
    %1463 = vmatprep.subr.mxu0 0.0
    %1464 = vmatpush2.msra.mxu0 0.0
    %1465 = vmatprep.subr.mxu0 0.0
    %1466 = vmatpush2.msra.mxu0 0.0
    %1467 = vmatprep.subr.mxu0 0.0
    %1468 = vmatpush2.msra.mxu0 0.0
    %1469 = vmatprep.mubr.f32.mxu0 0.0
    %1470 = vmatmul.mubr.f32.gmra.mxu0 %v1328
    %v1471 = vpop.f32.mrf.mxu0
    %v1472 = vadd.f32 0.0, %v1471
    %v1473 = vpop.f32.mrf.mxu0
    %v1474 = vadd.f32 0.0, %v1473
    %1475 = vdwg.mxu0
    %v1476 = vadd.f32 %v1330, %v1401
    %v1477 = vadd.f32 %v1331, %v1403
    %v1478 = vadd.f32 %v1332, %v1472
    %v1479 = vadd.f32 %v1333, %v1474
    %v1480 = vxor.u32 %v1476, 2147483648
    %v1481 = vmul.f32 %v1480, 1.442695
    %v1482 = vpow.pop %v1481
    %v1483 = vadd.f32 %v1482, 1.0
    %v1484 = vrcp.pop %v1483
    %v1485 = vmul.f32 1.0, %v1484
    %v1486 = vxor.u32 %v1477, 2147483648
    %v1487 = vmul.f32 %v1486, 1.442695
    %v1488 = vpow.pop %v1487
    %v1489 = vadd.f32 %v1488, 1.0
    %v1490 = vrcp.pop %v1489
    %v1491 = vmul.f32 1.0, %v1490
    %v1492 = vtanh.pop %v1478
    %v1493 = vxor.u32 %v1479, 2147483648
    %v1494 = vmul.f32 %v1493, 1.442695
    %v1495 = vpow.pop %v1494
    %v1496 = vadd.f32 %v1495, 1.0
    %v1497 = vrcp.pop %v1496
    %v1498 = vmul.f32 1.0, %v1497
    %v1499 = vmul.f32 %v1491, %v1326
    %v1500 = vmul.f32 %v1485, %v1492
    %v1501 = vadd.f32 %v1499, %v1500
    %v1502 = vtanh.pop %v1501
    %v1503 = vmul.f32 %v1498, %v1502
    %s1504 = scalar_lea.vmem [#allocation2], 192
    %v1505 = vld [vmem:[%s1504] sm:$0xff]
    %v1506 = vld [vmem:[%s1504 + $0x8] sm:$0xff]
    %v1507 = vld [vmem:[%s1504 + $0x10] sm:$0xff]
    %v1508 = vld [vmem:[%s1504 + $0x18] sm:$0xff]
    %1509 = vmatprep.subr.mxu0 %v450
    %1510 = vmatpush1.msra.mxu0 %v449
    %1511 = vmatprep.subr.mxu0 %v446
    %1512 = vmatpush1.msra.mxu0 %v445
    %1513 = vmatprep.subr.mxu0 %v442
    %1514 = vmatpush1.msra.mxu0 %v441
    %1515 = vmatprep.subr.mxu0 %v438
    %1516 = vmatpush1.msra.mxu0 %v437
    %1517 = vmatprep.subr.mxu0 %v434
    %1518 = vmatpush1.msra.mxu0 %v433
    %1519 = vmatprep.subr.mxu0 %v430
    %1520 = vmatpush1.msra.mxu0 %v429
    %1521 = vmatprep.subr.mxu0 %v426
    %1522 = vmatpush1.msra.mxu0 %v425
    %1523 = vmatprep.subr.mxu0 %v422
    %1524 = vmatpush1.msra.mxu0 %v421
    %1525 = vmatprep.subr.mxu0 %v418
    %1526 = vmatpush1.msra.mxu0 %v417
    %1527 = vmatprep.subr.mxu0 %v414
    %1528 = vmatpush1.msra.mxu0 %v413
    %1529 = vmatprep.subr.mxu0 %v410
    %1530 = vmatpush1.msra.mxu0 %v409
    %1531 = vmatprep.subr.mxu0 %v406
    %1532 = vmatpush1.msra.mxu0 %v405
    %1533 = vmatprep.subr.mxu0 %v402
    %1534 = vmatpush1.msra.mxu0 %v401
    %1535 = vmatprep.subr.mxu0 %v398
    %1536 = vmatpush1.msra.mxu0 %v397
    %1537 = vmatprep.subr.mxu0 %v394
    %1538 = vmatpush1.msra.mxu0 %v393
    %1539 = vmatprep.subr.mxu0 %v390
    %1540 = vmatpush1.msra.mxu0 %v389
    %1541 = vmatprep.subr.mxu0 0.0
    %1542 = vmatpush2.msra.mxu0 0.0
    %1543 = vmatprep.subr.mxu0 0.0
    %1544 = vmatpush2.msra.mxu0 0.0
    %1545 = vmatprep.subr.mxu0 0.0
    %1546 = vmatpush2.msra.mxu0 0.0
    %1547 = vmatprep.subr.mxu0 0.0
    %1548 = vmatpush2.msra.mxu0 0.0
    %1549 = vmatprep.subr.mxu0 0.0
    %1550 = vmatpush2.msra.mxu0 0.0
    %1551 = vmatprep.subr.mxu0 0.0
    %1552 = vmatpush2.msra.mxu0 0.0
    %1553 = vmatprep.subr.mxu0 0.0
    %1554 = vmatpush2.msra.mxu0 0.0
    %1555 = vmatprep.subr.mxu0 0.0
    %1556 = vmatpush2.msra.mxu0 0.0
    %1557 = vmatprep.subr.mxu0 0.0
    %1558 = vmatpush2.msra.mxu0 0.0
    %1559 = vmatprep.subr.mxu0 0.0
    %1560 = vmatpush2.msra.mxu0 0.0
    %1561 = vmatprep.subr.mxu0 0.0
    %1562 = vmatpush2.msra.mxu0 0.0
    %1563 = vmatprep.subr.mxu0 0.0
    %1564 = vmatpush2.msra.mxu0 0.0
    %1565 = vmatprep.subr.mxu0 0.0
    %1566 = vmatpush2.msra.mxu0 0.0
    %1567 = vmatprep.subr.mxu0 0.0
    %1568 = vmatpush2.msra.mxu0 0.0
    %1569 = vmatprep.subr.mxu0 0.0
    %1570 = vmatpush2.msra.mxu0 0.0
    %1571 = vmatprep.subr.mxu0 0.0
    %1572 = vmatpush2.msra.mxu0 0.0
    %1573 = vmatprep.mubr.f32.mxu0 0.0
    %1574 = vmatmul.mubr.f32.gmra.mxu0 %v1503
    %v1575 = vpop.f32.mrf.mxu0
    %v1576 = vadd.f32 0.0, %v1575
    %v1577 = vpop.f32.mrf.mxu0
    %v1578 = vadd.f32 0.0, %v1577
    %1579 = vdwg.mxu0
    %1580 = vmatprep.subr.mxu0 %v452
    %1581 = vmatpush1.msra.mxu0 %v451
    %1582 = vmatprep.subr.mxu0 %v448
    %1583 = vmatpush1.msra.mxu0 %v447
    %1584 = vmatprep.subr.mxu0 %v444
    %1585 = vmatpush1.msra.mxu0 %v443
    %1586 = vmatprep.subr.mxu0 %v440
    %1587 = vmatpush1.msra.mxu0 %v439
    %1588 = vmatprep.subr.mxu0 %v436
    %1589 = vmatpush1.msra.mxu0 %v435
    %1590 = vmatprep.subr.mxu0 %v432
    %1591 = vmatpush1.msra.mxu0 %v431
    %1592 = vmatprep.subr.mxu0 %v428
    %1593 = vmatpush1.msra.mxu0 %v427
    %1594 = vmatprep.subr.mxu0 %v424
    %1595 = vmatpush1.msra.mxu0 %v423
    %1596 = vmatprep.subr.mxu0 %v420
    %1597 = vmatpush1.msra.mxu0 %v419
    %1598 = vmatprep.subr.mxu0 %v416
    %1599 = vmatpush1.msra.mxu0 %v415
    %1600 = vmatprep.subr.mxu0 %v412
    %1601 = vmatpush1.msra.mxu0 %v411
    %1602 = vmatprep.subr.mxu0 %v408
    %1603 = vmatpush1.msra.mxu0 %v407
    %1604 = vmatprep.subr.mxu0 %v404
    %1605 = vmatpush1.msra.mxu0 %v403
    %1606 = vmatprep.subr.mxu0 %v400
    %1607 = vmatpush1.msra.mxu0 %v399
    %1608 = vmatprep.subr.mxu0 %v396
    %1609 = vmatpush1.msra.mxu0 %v395
    %1610 = vmatprep.subr.mxu0 %v392
    %1611 = vmatpush1.msra.mxu0 %v391
    %1612 = vmatprep.subr.mxu0 0.0
    %1613 = vmatpush2.msra.mxu0 0.0
    %1614 = vmatprep.subr.mxu0 0.0
    %1615 = vmatpush2.msra.mxu0 0.0
    %1616 = vmatprep.subr.mxu0 0.0
    %1617 = vmatpush2.msra.mxu0 0.0
    %1618 = vmatprep.subr.mxu0 0.0
    %1619 = vmatpush2.msra.mxu0 0.0
    %1620 = vmatprep.subr.mxu0 0.0
    %1621 = vmatpush2.msra.mxu0 0.0
    %1622 = vmatprep.subr.mxu0 0.0
    %1623 = vmatpush2.msra.mxu0 0.0
    %1624 = vmatprep.subr.mxu0 0.0
    %1625 = vmatpush2.msra.mxu0 0.0
    %1626 = vmatprep.subr.mxu0 0.0
    %1627 = vmatpush2.msra.mxu0 0.0
    %1628 = vmatprep.subr.mxu0 0.0
    %1629 = vmatpush2.msra.mxu0 0.0
    %1630 = vmatprep.subr.mxu0 0.0
    %1631 = vmatpush2.msra.mxu0 0.0
    %1632 = vmatprep.subr.mxu0 0.0
    %1633 = vmatpush2.msra.mxu0 0.0
    %1634 = vmatprep.subr.mxu0 0.0
    %1635 = vmatpush2.msra.mxu0 0.0
    %1636 = vmatprep.subr.mxu0 0.0
    %1637 = vmatpush2.msra.mxu0 0.0
    %1638 = vmatprep.subr.mxu0 0.0
    %1639 = vmatpush2.msra.mxu0 0.0
    %1640 = vmatprep.subr.mxu0 0.0
    %1641 = vmatpush2.msra.mxu0 0.0
    %1642 = vmatprep.subr.mxu0 0.0
    %1643 = vmatpush2.msra.mxu0 0.0
    %1644 = vmatprep.mubr.f32.mxu0 0.0
    %1645 = vmatmul.mubr.f32.gmra.mxu0 %v1503
    %v1646 = vpop.f32.mrf.mxu0
    %v1647 = vadd.f32 0.0, %v1646
    %v1648 = vpop.f32.mrf.mxu0
    %v1649 = vadd.f32 0.0, %v1648
    %1650 = vdwg.mxu0
    %v1651 = vadd.f32 %v1505, %v1576
    %v1652 = vadd.f32 %v1506, %v1578
    %v1653 = vadd.f32 %v1507, %v1647
    %v1654 = vadd.f32 %v1508, %v1649
    %v1655 = vxor.u32 %v1651, 2147483648
    %v1656 = vmul.f32 %v1655, 1.442695
    %v1657 = vpow.pop %v1656
    %v1658 = vadd.f32 %v1657, 1.0
    %v1659 = vrcp.pop %v1658
    %v1660 = vmul.f32 1.0, %v1659
    %v1661 = vxor.u32 %v1652, 2147483648
    %v1662 = vmul.f32 %v1661, 1.442695
    %v1663 = vpow.pop %v1662
    %v1664 = vadd.f32 %v1663, 1.0
    %v1665 = vrcp.pop %v1664
    %v1666 = vmul.f32 1.0, %v1665
    %v1667 = vtanh.pop %v1653
    %v1668 = vxor.u32 %v1654, 2147483648
    %v1669 = vmul.f32 %v1668, 1.442695
    %v1670 = vpow.pop %v1669
    %v1671 = vadd.f32 %v1670, 1.0
    %v1672 = vrcp.pop %v1671
    %v1673 = vmul.f32 1.0, %v1672
    %v1674 = vmul.f32 %v1666, %v1501
    %v1675 = vmul.f32 %v1660, %v1667
    %v1676 = vadd.f32 %v1674, %v1675
    %v1677 = vtanh.pop %v1676
    %v1678 = vmul.f32 %v1673, %v1677
    %s1679 = scalar_lea.vmem [#allocation2], 224
    %v1680 = vld [vmem:[%s1679] sm:$0xff]
    %v1681 = vld [vmem:[%s1679 + $0x8] sm:$0xff]
    %v1682 = vld [vmem:[%s1679 + $0x10] sm:$0xff]
    %v1683 = vld [vmem:[%s1679 + $0x18] sm:$0xff]
    %1684 = vmatprep.subr.mxu0 %v450
    %1685 = vmatpush1.msra.mxu0 %v449
    %1686 = vmatprep.subr.mxu0 %v446
    %1687 = vmatpush1.msra.mxu0 %v445
    %1688 = vmatprep.subr.mxu0 %v442
    %1689 = vmatpush1.msra.mxu0 %v441
    %1690 = vmatprep.subr.mxu0 %v438
    %1691 = vmatpush1.msra.mxu0 %v437
    %1692 = vmatprep.subr.mxu0 %v434
    %1693 = vmatpush1.msra.mxu0 %v433
    %1694 = vmatprep.subr.mxu0 %v430
    %1695 = vmatpush1.msra.mxu0 %v429
    %1696 = vmatprep.subr.mxu0 %v426
    %1697 = vmatpush1.msra.mxu0 %v425
    %1698 = vmatprep.subr.mxu0 %v422
    %1699 = vmatpush1.msra.mxu0 %v421
    %1700 = vmatprep.subr.mxu0 %v418
    %1701 = vmatpush1.msra.mxu0 %v417
    %1702 = vmatprep.subr.mxu0 %v414
    %1703 = vmatpush1.msra.mxu0 %v413
    %1704 = vmatprep.subr.mxu0 %v410
    %1705 = vmatpush1.msra.mxu0 %v409
    %1706 = vmatprep.subr.mxu0 %v406
    %1707 = vmatpush1.msra.mxu0 %v405
    %1708 = vmatprep.subr.mxu0 %v402
    %1709 = vmatpush1.msra.mxu0 %v401
    %1710 = vmatprep.subr.mxu0 %v398
    %1711 = vmatpush1.msra.mxu0 %v397
    %1712 = vmatprep.subr.mxu0 %v394
    %1713 = vmatpush1.msra.mxu0 %v393
    %1714 = vmatprep.subr.mxu0 %v390
    %1715 = vmatpush1.msra.mxu0 %v389
    %1716 = vmatprep.subr.mxu0 0.0
    %1717 = vmatpush2.msra.mxu0 0.0
    %1718 = vmatprep.subr.mxu0 0.0
    %1719 = vmatpush2.msra.mxu0 0.0
    %1720 = vmatprep.subr.mxu0 0.0
    %1721 = vmatpush2.msra.mxu0 0.0
    %1722 = vmatprep.subr.mxu0 0.0
    %1723 = vmatpush2.msra.mxu0 0.0
    %1724 = vmatprep.subr.mxu0 0.0
    %1725 = vmatpush2.msra.mxu0 0.0
    %1726 = vmatprep.subr.mxu0 0.0
    %1727 = vmatpush2.msra.mxu0 0.0
    %1728 = vmatprep.subr.mxu0 0.0
    %1729 = vmatpush2.msra.mxu0 0.0
    %1730 = vmatprep.subr.mxu0 0.0
    %1731 = vmatpush2.msra.mxu0 0.0
    %1732 = vmatprep.subr.mxu0 0.0
    %1733 = vmatpush2.msra.mxu0 0.0
    %1734 = vmatprep.subr.mxu0 0.0
    %1735 = vmatpush2.msra.mxu0 0.0
    %1736 = vmatprep.subr.mxu0 0.0
    %1737 = vmatpush2.msra.mxu0 0.0
    %1738 = vmatprep.subr.mxu0 0.0
    %1739 = vmatpush2.msra.mxu0 0.0
    %1740 = vmatprep.subr.mxu0 0.0
    %1741 = vmatpush2.msra.mxu0 0.0
    %1742 = vmatprep.subr.mxu0 0.0
    %1743 = vmatpush2.msra.mxu0 0.0
    %1744 = vmatprep.subr.mxu0 0.0
    %1745 = vmatpush2.msra.mxu0 0.0
    %1746 = vmatprep.subr.mxu0 0.0
    %1747 = vmatpush2.msra.mxu0 0.0
    %1748 = vmatprep.mubr.f32.mxu0 0.0
    %1749 = vmatmul.mubr.f32.gmra.mxu0 %v1678
    %v1750 = vpop.f32.mrf.mxu0
    %v1751 = vadd.f32 0.0, %v1750
    %v1752 = vpop.f32.mrf.mxu0
    %v1753 = vadd.f32 0.0, %v1752
    %1754 = vdwg.mxu0
    %1755 = vmatprep.subr.mxu0 %v452
    %1756 = vmatpush1.msra.mxu0 %v451
    %1757 = vmatprep.subr.mxu0 %v448
    %1758 = vmatpush1.msra.mxu0 %v447
    %1759 = vmatprep.subr.mxu0 %v444
    %1760 = vmatpush1.msra.mxu0 %v443
    %1761 = vmatprep.subr.mxu0 %v440
    %1762 = vmatpush1.msra.mxu0 %v439
    %1763 = vmatprep.subr.mxu0 %v436
    %1764 = vmatpush1.msra.mxu0 %v435
    %1765 = vmatprep.subr.mxu0 %v432
    %1766 = vmatpush1.msra.mxu0 %v431
    %1767 = vmatprep.subr.mxu0 %v428
    %1768 = vmatpush1.msra.mxu0 %v427
    %1769 = vmatprep.subr.mxu0 %v424
    %1770 = vmatpush1.msra.mxu0 %v423
    %1771 = vmatprep.subr.mxu0 %v420
    %1772 = vmatpush1.msra.mxu0 %v419
    %1773 = vmatprep.subr.mxu0 %v416
    %1774 = vmatpush1.msra.mxu0 %v415
    %1775 = vmatprep.subr.mxu0 %v412
    %1776 = vmatpush1.msra.mxu0 %v411
    %1777 = vmatprep.subr.mxu0 %v408
    %1778 = vmatpush1.msra.mxu0 %v407
    %1779 = vmatprep.subr.mxu0 %v404
    %1780 = vmatpush1.msra.mxu0 %v403
    %1781 = vmatprep.subr.mxu0 %v400
    %1782 = vmatpush1.msra.mxu0 %v399
    %1783 = vmatprep.subr.mxu0 %v396
    %1784 = vmatpush1.msra.mxu0 %v395
    %1785 = vmatprep.subr.mxu0 %v392
    %1786 = vmatpush1.msra.mxu0 %v391
    %1787 = vmatprep.subr.mxu0 0.0
    %1788 = vmatpush2.msra.mxu0 0.0
    %1789 = vmatprep.subr.mxu0 0.0
    %1790 = vmatpush2.msra.mxu0 0.0
    %1791 = vmatprep.subr.mxu0 0.0
    %1792 = vmatpush2.msra.mxu0 0.0
    %1793 = vmatprep.subr.mxu0 0.0
    %1794 = vmatpush2.msra.mxu0 0.0
    %1795 = vmatprep.subr.mxu0 0.0
    %1796 = vmatpush2.msra.mxu0 0.0
    %1797 = vmatprep.subr.mxu0 0.0
    %1798 = vmatpush2.msra.mxu0 0.0
    %1799 = vmatprep.subr.mxu0 0.0
    %1800 = vmatpush2.msra.mxu0 0.0
    %1801 = vmatprep.subr.mxu0 0.0
    %1802 = vmatpush2.msra.mxu0 0.0
    %1803 = vmatprep.subr.mxu0 0.0
    %1804 = vmatpush2.msra.mxu0 0.0
    %1805 = vmatprep.subr.mxu0 0.0
    %1806 = vmatpush2.msra.mxu0 0.0
    %1807 = vmatprep.subr.mxu0 0.0
    %1808 = vmatpush2.msra.mxu0 0.0
    %1809 = vmatprep.subr.mxu0 0.0
    %1810 = vmatpush2.msra.mxu0 0.0
    %1811 = vmatprep.subr.mxu0 0.0
    %1812 = vmatpush2.msra.mxu0 0.0
    %1813 = vmatprep.subr.mxu0 0.0
    %1814 = vmatpush2.msra.mxu0 0.0
    %1815 = vmatprep.subr.mxu0 0.0
    %1816 = vmatpush2.msra.mxu0 0.0
    %1817 = vmatprep.subr.mxu0 0.0
    %1818 = vmatpush2.msra.mxu0 0.0
    %1819 = vmatprep.mubr.f32.mxu0 0.0
    %1820 = vmatmul.mubr.f32.gmra.mxu0 %v1678
    %v1821 = vpop.f32.mrf.mxu0
    %v1822 = vadd.f32 0.0, %v1821
    %v1823 = vpop.f32.mrf.mxu0
    %v1824 = vadd.f32 0.0, %v1823
    %1825 = vdwg.mxu0
    %v1826 = vadd.f32 %v1680, %v1751
    %v1827 = vadd.f32 %v1681, %v1753
    %v1828 = vadd.f32 %v1682, %v1822
    %v1829 = vadd.f32 %v1683, %v1824
    %v1830 = vxor.u32 %v1826, 2147483648
    %v1831 = vmul.f32 %v1830, 1.442695
    %v1832 = vpow.pop %v1831
    %v1833 = vadd.f32 %v1832, 1.0
    %v1834 = vrcp.pop %v1833
    %v1835 = vmul.f32 1.0, %v1834
    %v1836 = vxor.u32 %v1827, 2147483648
    %v1837 = vmul.f32 %v1836, 1.442695
    %v1838 = vpow.pop %v1837
    %v1839 = vadd.f32 %v1838, 1.0
    %v1840 = vrcp.pop %v1839
    %v1841 = vmul.f32 1.0, %v1840
    %v1842 = vtanh.pop %v1828
    %v1843 = vxor.u32 %v1829, 2147483648
    %v1844 = vmul.f32 %v1843, 1.442695
    %v1845 = vpow.pop %v1844
    %v1846 = vadd.f32 %v1845, 1.0
    %v1847 = vrcp.pop %v1846
    %v1848 = vmul.f32 1.0, %v1847
    %v1849 = vmul.f32 %v1841, %v1676
    %v1850 = vmul.f32 %v1835, %v1842
    %v1851 = vadd.f32 %v1849, %v1850
    %v1852 = vtanh.pop %v1851
    %v1853 = vmul.f32 %v1848, %v1852
    %1854 = vst [vmem:[#allocation9] sm:$0xff] %v1853
    %1855 = vst [vmem:[#allocation10] sm:$0xff] %v1851
    // Predicated region
    $region34: #{tpu_custom_call.1} parent=1 // pred_check
      _
    $region35: #{tpu_custom_call.1} parent=1 // pred_check_branch
      %1857 = sbr.rel (0) target = $region37
    $region36: #{tpu_custom_call.1} parent=1 // pred_region
      %s1859 = ssub.s32 128, 128
      %1860 = vsyncadd [#allocation5], %s1859
      %s1862 = sshll.u32 [#allocation9], 4
      %s1863 = int_to_ptr.vmem [resolvable:$true] %s1862
      %1865 = dma.vmem_to_hbm [thread:$0]  %s1863, 128, %s4, [#allocation5]
    $region37: #{tpu_custom_call.1} parent=1 // pred_fallthru
      _
    // Predicated region
    $region38: #{tpu_custom_call.1} parent=1 // pred_check
      _
    $region39: #{tpu_custom_call.1} parent=1 // pred_check_branch
      %1867 = sbr.rel (0) target = $region41
    $region40: #{tpu_custom_call.1} parent=1 // pred_region
      %s1869 = ssub.s32 128, 128
      %1870 = vsyncadd [#allocation11], %s1869
      %s1872 = sshll.u32 [#allocation10], 4
      %s1873 = int_to_ptr.vmem [resolvable:$true] %s1872
      %1875 = dma.vmem_to_hbm [thread:$0]  %s1873, 128, %s5, [#allocation11]
    $region41: #{tpu_custom_call.1} parent=1 // pred_fallthru
      _
    // Predicated region
    $region42: #{tpu_custom_call.1} parent=1 // pred_check
      _
    $region43: #{tpu_custom_call.1} parent=1 // pred_check_branch
      %1877 = sbr.rel (0) target = $region45
    $region44: #{tpu_custom_call.1} parent=1 // pred_region
      %1878 = dma.done [#allocation5], 128
    $region45: #{tpu_custom_call.1} parent=1 // pred_fallthru
      _
    // Predicated region
    $region46: #{tpu_custom_call.1} parent=1 // pred_check
      _
    $region47: #{tpu_custom_call.1} parent=1 // pred_check_branch
      %1880 = sbr.rel (0) target = $region49
    $region48: #{tpu_custom_call.1} parent=1 // pred_region
      %1881 = dma.done [#allocation11], 128
    $region49: #{tpu_custom_call.1} parent=1 // pred_fallthru
      _
    %1882 = vsyncpa [#allocation4], 1
    %1883 = vsyncpa [#allocation7], 1
    %1884 = vsyncpa [#allocation5], 1
    %1885 = vsyncpa [#allocation11], 1

</llo_original>
